<compile_context>
chip_gen: v7x
topology: tpu7x:2x2x1
jax: 0.10.0
libtpu: 0.0.40
codegen_flags: <defaults>
</compile_context>

<pallas_src>
import math

import jax
import jax.numpy as jnp
import numpy as np
from jax import lax
from jax.experimental import pallas as pl
from jax.experimental.pallas import tpu as pltpu


def make_kernel(alpha, num_steps, use_tanh):
    act = jnp.tanh if use_tanh else (lambda v: jnp.maximum(v, 0.0))
    one_minus_alpha = 1.0 - alpha

    def kernel(x_ref, ctx0_ref, e1_ref, e2_ref,
               wcc_ref, bcc_ref, wic_ref, bic_ref,
               wmap_ref, bmap_ref, whh_ref, bhh_ref,
               gamma_ref, beta_ref, who_ref, bho_ref,
               out_ref, ctx_out_ref,
               ctx_scr, xic_scr, hb_scr, zx_scr, hid_scr):
        n_rows = x_ref.shape[0]                   # t_block * B  (B sublane-padded)
        bsz, C = ctx0_ref.shape
        H = whh_ref.shape[0]
        t_block = n_rows // bsz

        # Carried context lives in VMEM scratch across time blocks.
        @pl.when(pl.program_id(0) == 0)
        def _init():
            ctx_scr[...] = ctx0_ref[...]

        # ---- Hoisted x-only matmuls for the whole time block ---------------
        # One big (t_block*B)-row bf16 MXU matmul each, instead of t_block tiny
        # M=B matmuls sitting on the serial recurrence chain.
        xf = x_ref[...].astype(jnp.bfloat16)
        xic_scr[...] = (jnp.dot(xf, wic_ref[...],
                                preferred_element_type=jnp.float32) + bic_ref[...])
        hb_scr[...] = jnp.dot(xf, bmap_ref[...], preferred_element_type=jnp.float32)
        zx_scr[...] = jnp.dot(xf, e2_ref[...], preferred_element_type=jnp.float32)

        def inner_step(ctx, z_x, x_ic, hid_bias):
            # context path: act(c2c(ctx) + i2c(x)); leaky blend with alpha.
            # Kept in f32 (serially compounding chain, tiny matmul anyway).
            pre = (jnp.dot(ctx, wcc_ref[...], preferred_element_type=jnp.float32)
                   + bcc_ref[...] + x_ic)
            ctx_upd = ctx * one_minus_alpha + act(pre) * alpha

            # input-map path (uses the OLD context, as in the PyTorch module):
            # hidden[b,h] = sum_{c,i} ctx[b,c] x[b,i] Wmap_k[c*I+i,h] + (x@bmap_k)[b,h]
            z = (jnp.dot(ctx.astype(jnp.bfloat16), e1_ref[...],
                         preferred_element_type=jnp.float32) * z_x)
            hidden = act(jnp.dot(z.astype(jnp.bfloat16), wmap_ref[...],
                                 preferred_element_type=jnp.float32) + hid_bias)

            # hidden2hidden + LayerNorm (fused one-pass stats) + residual
            hn = (jnp.dot(hidden.astype(jnp.bfloat16), whh_ref[...],
                          preferred_element_type=jnp.float32) + bhh_ref[...])
            mu = jnp.mean(hn, axis=-1, keepdims=True)
            mu2 = jnp.mean(hn * hn, axis=-1, keepdims=True)
            var = mu2 - mu * mu
            hn = (hn - mu) * lax.rsqrt(var + 1e-5) * gamma_ref[...] + beta_ref[...]
            return hidden + act(hn), ctx_upd

        def t_body(t, ctx):
            r0 = pl.multiple_of(t * bsz, 8)        # bsz is a multiple of 8
            x_ic = xic_scr[pl.ds(r0, bsz), :]
            hid_bias = hb_scr[pl.ds(r0, bsz), :]
            z_x = zx_scr[pl.ds(r0, bsz), :]

            if num_steps <= 2:                     # short: static unroll
                hidden, ctx_cur = None, ctx
                for _ in range(num_steps):
                    hidden, ctx_cur = inner_step(ctx_cur, z_x, x_ic, hid_bias)
            else:                                  # longer: unrolled fori_loop
                def body(_, carry):
                    return inner_step(carry[1], z_x, x_ic, hid_bias)
                hidden, ctx_cur = lax.fori_loop(
                    0, num_steps, body,
                    (jnp.zeros((bsz, H), jnp.float32), ctx), unroll=True)

            hid_scr[pl.ds(r0, bsz), :] = hidden    # stash for deferred projection
            return ctx_cur

        ctx_final = lax.fori_loop(0, t_block, t_body, ctx_scr[...])
        ctx_scr[...] = ctx_final
        ctx_out_ref[...] = ctx_final

        # ---- Deferred output projection: one bf16 matmul + one dense store --
        hf = hid_scr[...].astype(jnp.bfloat16)
        out_ref[...] = (jnp.dot(hf, who_ref[...],
                                preferred_element_type=jnp.float32)
                        + bho_ref[...]).astype(out_ref.dtype)

    return kernel


def input_map_ctrnn_forward(x_seq, ctx0, params, *, alpha, num_steps=1,
                            use_tanh=False, t_block=None):
    """Pallas implementation of InputMapCTRNN.forward (x_seq: (T, B, I))."""
    assert num_steps >= 1, "num_steps must be >= 1"
    T, B, I = x_seq.shape
    Wcc, bcc, Wic, bic, Wmap, bmap, Whh, bhh, gamma, beta, Who, bho = params
    C = Wcc.shape[0]
    H = Whh.shape[0]
    O = Who.shape[0]

    if ctx0 is None:
        ctx0 = jnp.zeros((B, C), jnp.float32)

    # Pad batch to a multiple of 8 sublanes (free at tiny B; keeps every
    # in-kernel slice 8-row aligned).  Pad rows are sliced away at the end.
    Bp = ((B + 7) // 8) * 8
    if Bp != B:
        x_seq = jnp.pad(x_seq, ((0, 0), (0, Bp - B), (0, 0)))
        ctx0_p = jnp.pad(ctx0, ((0, Bp - B), (0, 0)))
    else:
        ctx0_p = ctx0

    if t_block is None:
        t_block = T
        for cand in (256, 128, 64, 32, 16, 8, 4, 2, 1):
            if cand <= T and T % cand == 0:
                t_block = cand
                break
    assert T % t_block == 0, "t_block must divide T"
    rows = t_block * Bp

    f32, bf16 = jnp.float32, jnp.bfloat16

    # glue: repack weights to kernel-friendly (in, out) layouts
    wcc_t = Wcc.T.astype(f32)                        # (C, C)  -- kept f32
    wic_t = Wic.T.astype(bf16)                       # (I, C)
    whh_t = Whh.T.astype(bf16)                       # (H, H)
    who_t = Who.T.astype(bf16)                       # (H, O)
    # torch Linear weight of context2input_map has shape (H*I, C) with flat
    # out index k = h*I + i.  Kernel wants Wmap_k[c*I + i, h] = Wmap[h*I+i, c].
    wmap_k = Wmap.reshape(H, I, C).transpose(2, 1, 0).reshape(C * I, H).astype(bf16)
    bmap_k = bmap.reshape(H, I).T.astype(bf16)       # (I, H)
    bcc2, bic2 = bcc[None, :].astype(f32), bic[None, :].astype(f32)
    bhh2, bho2 = bhh[None, :].astype(f32), bho[None, :].astype(f32)
    gamma2, beta2 = gamma[None, :].astype(f32), beta[None, :].astype(f32)

    # Khatri-Rao expansion matrices (compile-time constants, exact in bf16):
    #   e1[c, c*I+i] = 1  (repeat ctx along lanes),  e2[i, c*I+i] = 1 (tile x).
    idx = np.arange(C * I)
    e1 = jnp.asarray(idx // I == np.arange(C)[:, None], bf16)   # (C, C*I)
    e2 = jnp.asarray(idx % I == np.arange(I)[:, None], bf16)    # (I, C*I)

    x_flat = x_seq.reshape(T * Bp, I)                # time-major row flattening

    def _const(shape):
        n = len(shape)
        return pl.BlockSpec(shape, lambda t, _n=n: (0,) * _n)

    kernel = make_kernel(float(alpha), int(num_steps), bool(use_tanh))

    grid_spec = pltpu.PrefetchScalarGridSpec(
        num_scalar_prefetch=0,
        grid=(T // t_block,),                        # one step per time block
        in_specs=[
            pl.BlockSpec((rows, I), lambda t: (t, 0)),   # x (flattened rows)
            _const((Bp, C)),                             # ctx0
            _const((C, C * I)), _const((I, C * I)),      # e1, e2
            _const((C, C)), _const((1, C)),              # context2context
            _const((I, C)), _const((1, C)),              # input2context
            _const((C * I, H)), _const((I, H)),          # context2input_map (repacked)
            _const((H, H)), _const((1, H)),              # hidden2hidden
            _const((1, H)), _const((1, H)),              # layer-norm gamma / beta
            _const((H, O)), _const((1, O)),              # hidden2output
        ],
        out_specs=[
            pl.BlockSpec((rows, O), lambda t: (t, 0)),   # outputs (flattened rows)
            _const((Bp, C)),                             # final context
        ],
        scratch_shapes=[
            pltpu.VMEM((Bp, C), jnp.float32),            # carried context
            pltpu.VMEM((rows, C), jnp.float32),          # x @ Wic + bic
            pltpu.VMEM((rows, H), jnp.float32),          # x @ bmap_k
            pltpu.VMEM((rows, C * I), jnp.float32),      # x @ e2
            pltpu.VMEM((rows, H), jnp.float32),          # per-step hidden
        ],
    )

    out_flat, ctx_final = pl.pallas_call(
        kernel,
        out_shape=(jax.ShapeDtypeStruct((T * Bp, O), jnp.float32),
                   jax.ShapeDtypeStruct((Bp, C), jnp.float32)),
        grid_spec=grid_spec,
        compiler_params=pltpu.CompilerParams(dimension_semantics=("arbitrary",)),
    )(x_flat, ctx0_p, e1, e2,
      wcc_t, bcc2, wic_t, bic2,
      wmap_k, bmap_k,
      whh_t, bhh2, gamma2, beta2,
      who_t, bho2)

    outputs = out_flat.reshape(T, Bp, O)[:, :B, :]
    return outputs, ctx_final[:B]


def ctrnn_ref(x_seq, ctx0, params, alpha, num_steps, use_tanh):
    """Pure-JAX reference mirroring the PyTorch forward."""
    act = jnp.tanh if use_tanh else (lambda v: jnp.maximum(v, 0.0))
    Wcc, bcc, Wic, bic, Wmap, bmap, Whh, bhh, gamma, beta, Who, bho = params
    H = Whh.shape[0]
    I = Wic.shape[1]

    def recurrence(x, ctx):
        imap = (ctx @ Wmap.T + bmap).reshape(-1, H, I)
        ctx_new = act(ctx @ Wcc.T + bcc + x @ Wic.T + bic)
        ctx2 = ctx * (1.0 - alpha) + ctx_new * alpha
        hidden = jnp.einsum('bhi,bi->bh', imap, x)
        hidden = act(hidden)
        hn = hidden @ Whh.T + bhh
        mu = hn.mean(-1, keepdims=True)
        var = ((hn - mu) ** 2).mean(-1, keepdims=True)
        hn = (hn - mu) / jnp.sqrt(var + 1e-5) * gamma + beta
        hidden = hidden + act(hn)
        out = hidden @ Who.T + bho
        return out, ctx2

    outs = []
    ctx = ctx0
    for i in range(x_seq.shape[0]):
        out = None
        for _ in range(num_steps):
            out, ctx = recurrence(x_seq[i], ctx)
        outs.append(out)
    return jnp.stack(outs, 0), ctx


if __name__ == "__main__":
    # module hyper-params (small)
    input_size, context_size, hidden_size, output_size = 8, 16, 32, 4
    batch, seq = 2, 8

    key = jax.random.PRNGKey(0)
    ks = jax.random.split(key, 12)

    def linear_init(kw, kb, out_dim, in_dim):
        bound = 1.0 / math.sqrt(in_dim)
        W = jax.random.uniform(kw, (out_dim, in_dim), jnp.float32, -bound, bound)
        b = jax.random.uniform(kb, (out_dim,), jnp.float32, -bound, bound)
        return W, b

    Wcc, bcc = linear_init(ks[0], ks[1], context_size, context_size)
    Wic, bic = linear_init(ks[2], ks[3], context_size, input_size)
    Wmap, bmap = linear_init(ks[4], ks[5], input_size * hidden_size, context_size)
    Whh, bhh = linear_init(ks[6], ks[7], hidden_size, hidden_size)
    Who, bho = linear_init(ks[8], ks[9], output_size, hidden_size)
    gamma = jnp.ones((hidden_size,), jnp.float32)   # torch LayerNorm default init
    beta = jnp.zeros((hidden_size,), jnp.float32)
    params = (Wcc, bcc, Wic, bic, Wmap, bmap, Whh, bhh, gamma, beta, Who, bho)

    x_seq = jax.random.normal(ks[10], (seq, batch, input_size), jnp.float32)
    ctx0 = jnp.zeros((batch, context_size), jnp.float32)  # init_hidden

    configs = [
        # dt=None (alpha=1), ReLU, single inner step, multi time-block carry
        dict(alpha=1.0, num_steps=1, use_tanh=False, t_block=4),
        # dt=40 (alpha=0.4), tanh, 3 inner steps, default (single) time block
        dict(alpha=0.4, num_steps=3, use_tanh=True, t_block=None),
    ]
    for cfg in configs:
        outs, ctx_f = input_map_ctrnn_forward(
            x_seq, ctx0, params, alpha=cfg["alpha"], num_steps=cfg["num_steps"],
            use_tanh=cfg["use_tanh"], t_block=cfg["t_block"])
        outs, ctx_f = jax.block_until_ready((outs, ctx_f))

        outs_ref, ctx_ref = ctrnn_ref(x_seq, ctx0, params, cfg["alpha"],
                                      cfg["num_steps"], cfg["use_tanh"])
        np.testing.assert_allclose(np.asarray(outs), np.asarray(outs_ref),
                                   rtol=2e-2, atol=2e-2)
        np.testing.assert_allclose(np.asarray(ctx_f), np.asarray(ctx_ref),
                                   rtol=2e-2, atol=2e-2)

    print("KERNEL_OK")
</pallas_src>

<mosaic_0001>
module attributes {stable_mosaic.version = 11 : i64} {
  func.func @kernel(%arg0: i32, %arg1: memref<32x8xf32, #tpu.memory_space<vmem>>, %arg2: memref<8x16xf32, #tpu.memory_space<vmem>>, %arg3: memref<16x128xbf16, #tpu.memory_space<vmem>>, %arg4: memref<8x128xbf16, #tpu.memory_space<vmem>>, %arg5: memref<16x16xf32, #tpu.memory_space<vmem>>, %arg6: memref<1x16xf32, #tpu.memory_space<vmem>>, %arg7: memref<8x16xbf16, #tpu.memory_space<vmem>>, %arg8: memref<1x16xf32, #tpu.memory_space<vmem>>, %arg9: memref<128x32xbf16, #tpu.memory_space<vmem>>, %arg10: memref<8x32xbf16, #tpu.memory_space<vmem>>, %arg11: memref<32x32xbf16, #tpu.memory_space<vmem>>, %arg12: memref<1x32xf32, #tpu.memory_space<vmem>>, %arg13: memref<1x32xf32, #tpu.memory_space<vmem>>, %arg14: memref<1x32xf32, #tpu.memory_space<vmem>>, %arg15: memref<32x4xbf16, #tpu.memory_space<vmem>>, %arg16: memref<1x4xf32, #tpu.memory_space<vmem>>, %arg17: memref<32x4xf32, #tpu.memory_space<vmem>>, %arg18: memref<8x16xf32, #tpu.memory_space<vmem>>, %arg19: memref<8x16xf32, #tpu.memory_space<vmem>>, %arg20: memref<32x16xf32, #tpu.memory_space<vmem>>, %arg21: memref<32x32xf32, #tpu.memory_space<vmem>>, %arg22: memref<32x128xf32, #tpu.memory_space<vmem>>, %arg23: memref<32x32xf32, #tpu.memory_space<vmem>>) attributes {dimension_semantics = [#tpu.dimension_semantics<arbitrary>], iteration_bounds = array<i64: 2>, scalar_prefetch = 0 : i64, scratch_operands = 5 : i64, tpu.core_type = #tpu.core_type<tc>, window_params = [{transform_indices = @transform_0, window_bounds = array<i64: 32, 8>}, {pipeline_mode = #tpu.pipeline_mode<synchronous>, transform_indices = @transform_1, window_bounds = array<i64: 8, 16>}, {pipeline_mode = #tpu.pipeline_mode<synchronous>, transform_indices = @transform_2, window_bounds = array<i64: 16, 128>}, {pipeline_mode = #tpu.pipeline_mode<synchronous>, transform_indices = @transform_3, window_bounds = array<i64: 8, 128>}, {pipeline_mode = #tpu.pipeline_mode<synchronous>, transform_indices = @transform_4, window_bounds = array<i64: 16, 16>}, {pipeline_mode = #tpu.pipeline_mode<synchronous>, transform_indices = @transform_5, window_bounds = array<i64: 1, 16>}, {pipeline_mode = #tpu.pipeline_mode<synchronous>, transform_indices = @transform_6, window_bounds = array<i64: 8, 16>}, {pipeline_mode = #tpu.pipeline_mode<synchronous>, transform_indices = @transform_7, window_bounds = array<i64: 1, 16>}, {pipeline_mode = #tpu.pipeline_mode<synchronous>, transform_indices = @transform_8, window_bounds = array<i64: 128, 32>}, {pipeline_mode = #tpu.pipeline_mode<synchronous>, transform_indices = @transform_9, window_bounds = array<i64: 8, 32>}, {pipeline_mode = #tpu.pipeline_mode<synchronous>, transform_indices = @transform_10, window_bounds = array<i64: 32, 32>}, {pipeline_mode = #tpu.pipeline_mode<synchronous>, transform_indices = @transform_11, window_bounds = array<i64: 1, 32>}, {pipeline_mode = #tpu.pipeline_mode<synchronous>, transform_indices = @transform_12, window_bounds = array<i64: 1, 32>}, {pipeline_mode = #tpu.pipeline_mode<synchronous>, transform_indices = @transform_13, window_bounds = array<i64: 1, 32>}, {pipeline_mode = #tpu.pipeline_mode<synchronous>, transform_indices = @transform_14, window_bounds = array<i64: 32, 4>}, {pipeline_mode = #tpu.pipeline_mode<synchronous>, transform_indices = @transform_15, window_bounds = array<i64: 1, 4>}, {transform_indices = @transform_16, window_bounds = array<i64: 32, 4>}, {pipeline_mode = #tpu.pipeline_mode<synchronous>, transform_indices = @transform_17, window_bounds = array<i64: 8, 16>}]} {
    %c0_i32 = arith.constant 0 : i32
    %0 = arith.cmpi eq, %arg0, %c0_i32 : i32
    %1 = arith.extui %0 : i1 to i32
    %c0_i32_0 = arith.constant 0 : i32
    %2 = arith.cmpi ne, %1, %c0_i32_0 : i32
    scf.if %2 {
      %c0_35 = arith.constant 0 : index
      %c0_36 = arith.constant 0 : index
      %30 = vector.load %arg2[%c0_35, %c0_36] : memref<8x16xf32, #tpu.memory_space<vmem>>, vector<8x16xf32>
      %c0_37 = arith.constant 0 : index
      %c0_38 = arith.constant 0 : index
      %31 = vector.load %arg19[%c0_37, %c0_38] : memref<8x16xf32, #tpu.memory_space<vmem>>, vector<8x16xf32>
      tpu.vector_store %arg19[%c0_37, %c0_38], %30 {strides = array<i32>} : memref<8x16xf32, #tpu.memory_space<vmem>>, vector<8x16xf32>,
    } else {
    }
    %c0 = arith.constant 0 : index
    %c0_1 = arith.constant 0 : index
    %3 = vector.load %arg1[%c0, %c0_1] : memref<32x8xf32, #tpu.memory_space<vmem>>, vector<32x8xf32>
    %4 = arith.truncf %3 : vector<32x8xf32> to vector<32x8xbf16>
    %c0_2 = arith.constant 0 : index
    %c0_3 = arith.constant 0 : index
    %5 = vector.load %arg7[%c0_2, %c0_3] : memref<8x16xbf16, #tpu.memory_space<vmem>>, vector<8x16xbf16>
    %cst = arith.constant dense<0.000000e+00> : vector<32x16xf32>
    %6 = tpu.matmul %4, %5, %cst {dimension_numbers = #tpu.dot_dimension_numbers<[1], [0], [0], [1], [0, 0, 1, 1], [], []>} : vector<32x8xbf16>, vector<8x16xbf16>, vector<32x16xf32> -> vector<32x16xf32>
    %c0_4 = arith.constant 0 : index
    %c0_5 = arith.constant 0 : index
    %7 = vector.load %arg8[%c0_4, %c0_5] : memref<1x16xf32, #tpu.memory_space<vmem>>, vector<1x16xf32>
    %8 = vector.broadcast %7 : vector<1x16xf32> to vector<32x16xf32>
    %9 = arith.addf %6, %8 : vector<32x16xf32>
    %c0_6 = arith.constant 0 : index
    %c0_7 = arith.constant 0 : index
    %10 = vector.load %arg20[%c0_6, %c0_7] : memref<32x16xf32, #tpu.memory_space<vmem>>, vector<32x16xf32>
    tpu.vector_store %arg20[%c0_6, %c0_7], %9 {strides = array<i32>} : memref<32x16xf32, #tpu.memory_space<vmem>>, vector<32x16xf32>,
    %c0_8 = arith.constant 0 : index
    %c0_9 = arith.constant 0 : index
    %11 = vector.load %arg10[%c0_8, %c0_9] : memref<8x32xbf16, #tpu.memory_space<vmem>>, vector<8x32xbf16>
    %cst_10 = arith.constant dense<0.000000e+00> : vector<32x32xf32>
    %12 = tpu.matmul %4, %11, %cst_10 {dimension_numbers = #tpu.dot_dimension_numbers<[1], [0], [0], [1], [0, 0, 1, 1], [], []>} : vector<32x8xbf16>, vector<8x32xbf16>, vector<32x32xf32> -> vector<32x32xf32>
    %c0_11 = arith.constant 0 : index
    %c0_12 = arith.constant 0 : index
    %13 = vector.load %arg21[%c0_11, %c0_12] : memref<32x32xf32, #tpu.memory_space<vmem>>, vector<32x32xf32>
    tpu.vector_store %arg21[%c0_11, %c0_12], %12 {strides = array<i32>} : memref<32x32xf32, #tpu.memory_space<vmem>>, vector<32x32xf32>,
    %c0_13 = arith.constant 0 : index
    %c0_14 = arith.constant 0 : index
    %14 = vector.load %arg4[%c0_13, %c0_14] : memref<8x128xbf16, #tpu.memory_space<vmem>>, vector<8x128xbf16>
    %cst_15 = arith.constant dense<0.000000e+00> : vector<32x128xf32>
    %15 = tpu.matmul %4, %14, %cst_15 {dimension_numbers = #tpu.dot_dimension_numbers<[1], [0], [0], [1], [0, 0, 1, 1], [], []>} : vector<32x8xbf16>, vector<8x128xbf16>, vector<32x128xf32> -> vector<32x128xf32>
    %c0_16 = arith.constant 0 : index
    %c0_17 = arith.constant 0 : index
    %16 = vector.load %arg22[%c0_16, %c0_17] : memref<32x128xf32, #tpu.memory_space<vmem>>, vector<32x128xf32>
    tpu.vector_store %arg22[%c0_16, %c0_17], %15 {strides = array<i32>} : memref<32x128xf32, #tpu.memory_space<vmem>>, vector<32x128xf32>,
    %c0_18 = arith.constant 0 : index
    %c0_19 = arith.constant 0 : index
    %17 = vector.load %arg19[%c0_18, %c0_19] : memref<8x16xf32, #tpu.memory_space<vmem>>, vector<8x16xf32>
    %c0_i32_20 = arith.constant 0 : i32
    %c4_i32 = arith.constant 4 : i32
    %18 = arith.addi %c0_i32_20, %c4_i32 : i32
    %c1_i32 = arith.constant 1 : i32
    %19 = scf.for %arg24 = %c0_i32_20 to %18 step %c1_i32 iter_args(%arg25 = %17) -> (vector<8x16xf32>)  : i32 {
      %c8_i32 = arith.constant 8 : i32
      %30 = arith.muli %arg24, %c8_i32 : i32
      %31 = tpu.assume_multiple %30, 8 : i32
      %32 = arith.index_cast %31 : i32 to index
      %c0_35 = arith.constant 0 : index
      %33 = vector.load %arg20[%32, %c0_35] : memref<32x16xf32, #tpu.memory_space<vmem>>, vector<8x16xf32>
      %34 = arith.index_cast %31 : i32 to index
      %c0_36 = arith.constant 0 : index
      %35 = vector.load %arg21[%34, %c0_36] : memref<32x32xf32, #tpu.memory_space<vmem>>, vector<8x32xf32>
      %36 = arith.index_cast %31 : i32 to index
      %c0_37 = arith.constant 0 : index
      %37 = vector.load %arg22[%36, %c0_37] : memref<32x128xf32, #tpu.memory_space<vmem>>, vector<8x128xf32>
      %c0_38 = arith.constant 0 : index
      %c0_39 = arith.constant 0 : index
      %38 = vector.load %arg5[%c0_38, %c0_39] : memref<16x16xf32, #tpu.memory_space<vmem>>, vector<16x16xf32>
      %cst_40 = arith.constant dense<0.000000e+00> : vector<8x16xf32>
      %39 = tpu.matmul %arg25, %38, %cst_40 {dimension_numbers = #tpu.dot_dimension_numbers<[1], [0], [0], [1], [0, 0, 1, 1], [], []>} : vector<8x16xf32>, vector<16x16xf32>, vector<8x16xf32> -> vector<8x16xf32>
      %c0_41 = arith.constant 0 : index
      %c0_42 = arith.constant 0 : index
      %40 = vector.load %arg6[%c0_41, %c0_42] : memref<1x16xf32, #tpu.memory_space<vmem>>, vector<1x16xf32>
      %41 = vector.broadcast %40 : vector<1x16xf32> to vector<8x16xf32>
      %42 = arith.addf %39, %41 : vector<8x16xf32>
      %43 = arith.addf %42, %33 : vector<8x16xf32>
      %cst_43 = arith.constant 0.000000e+00 : f32
      %44 = vector.broadcast %cst_43 : f32 to vector<8x16xf32>
      %45 = arith.mulf %arg25, %44 : vector<8x16xf32>
      %cst_44 = arith.constant 0.000000e+00 : f32
      %46 = vector.broadcast %cst_44 : f32 to vector<8x16xf32>
      %47 = arith.maximumf %43, %46 : vector<8x16xf32>
      %cst_45 = arith.constant 1.000000e+00 : f32
      %48 = vector.broadcast %cst_45 : f32 to vector<8x16xf32>
      %49 = arith.mulf %47, %48 : vector<8x16xf32>
      %50 = arith.addf %45, %49 : vector<8x16xf32>
      %51 = arith.truncf %arg25 : vector<8x16xf32> to vector<8x16xbf16>
      %c0_46 = arith.constant 0 : index
      %c0_47 = arith.constant 0 : index
      %52 = vector.load %arg3[%c0_46, %c0_47] : memref<16x128xbf16, #tpu.memory_space<vmem>>, vector<16x128xbf16>
      %cst_48 = arith.constant dense<0.000000e+00> : vector<8x128xf32>
      %53 = tpu.matmul %51, %52, %cst_48 {dimension_numbers = #tpu.dot_dimension_numbers<[1], [0], [0], [1], [0, 0, 1, 1], [], []>} : vector<8x16xbf16>, vector<16x128xbf16>, vector<8x128xf32> -> vector<8x128xf32>
      %54 = arith.mulf %53, %37 : vector<8x128xf32>
      %55 = arith.truncf %54 : vector<8x128xf32> to vector<8x128xbf16>
      %c0_49 = arith.constant 0 : index
      %c0_50 = arith.constant 0 : index
      %56 = vector.load %arg9[%c0_49, %c0_50] : memref<128x32xbf16, #tpu.memory_space<vmem>>, vector<128x32xbf16>
      %cst_51 = arith.constant dense<0.000000e+00> : vector<8x32xf32>
      %57 = tpu.matmul %55, %56, %cst_51 {dimension_numbers = #tpu.dot_dimension_numbers<[1], [0], [0], [1], [0, 0, 1, 1], [], []>} : vector<8x128xbf16>, vector<128x32xbf16>, vector<8x32xf32> -> vector<8x32xf32>
      %58 = arith.addf %57, %35 : vector<8x32xf32>
      %cst_52 = arith.constant 0.000000e+00 : f32
      %59 = vector.broadcast %cst_52 : f32 to vector<8x32xf32>
      %60 = arith.maximumf %58, %59 : vector<8x32xf32>
      %61 = arith.truncf %60 : vector<8x32xf32> to vector<8x32xbf16>
      %c0_53 = arith.constant 0 : index
      %c0_54 = arith.constant 0 : index
      %62 = vector.load %arg11[%c0_53, %c0_54] : memref<32x32xbf16, #tpu.memory_space<vmem>>, vector<32x32xbf16>
      %cst_55 = arith.constant dense<0.000000e+00> : vector<8x32xf32>
      %63 = tpu.matmul %61, %62, %cst_55 {dimension_numbers = #tpu.dot_dimension_numbers<[1], [0], [0], [1], [0, 0, 1, 1], [], []>} : vector<8x32xbf16>, vector<32x32xbf16>, vector<8x32xf32> -> vector<8x32xf32>
      %c0_56 = arith.constant 0 : index
      %c0_57 = arith.constant 0 : index
      %64 = vector.load %arg12[%c0_56, %c0_57] : memref<1x32xf32, #tpu.memory_space<vmem>>, vector<1x32xf32>
      %65 = vector.broadcast %64 : vector<1x32xf32> to vector<8x32xf32>
      %66 = arith.addf %63, %65 : vector<8x32xf32>
      %cst_58 = arith.constant dense<0.000000e+00> : vector<8xf32>
      %67 = vector.multi_reduction <add>, %66, %cst_58 [1] : vector<8x32xf32> to vector<8xf32>
      %68 = vector.shape_cast %67 : vector<8xf32> to vector<8x1xf32>
      %cst_59 = arith.constant 3.200000e+01 : f32
      %69 = vector.broadcast %cst_59 : f32 to vector<8x1xf32>
      %70 = arith.divf %68, %69 : vector<8x1xf32>
      %71 = arith.mulf %66, %66 : vector<8x32xf32>
      %cst_60 = arith.constant dense<0.000000e+00> : vector<8xf32>
      %72 = vector.multi_reduction <add>, %71, %cst_60 [1] : vector<8x32xf32> to vector<8xf32>
      %73 = vector.shape_cast %72 : vector<8xf32> to vector<8x1xf32>
      %cst_61 = arith.constant 3.200000e+01 : f32
      %74 = vector.broadcast %cst_61 : f32 to vector<8x1xf32>
      %75 = arith.divf %73, %74 : vector<8x1xf32>
      %76 = arith.mulf %70, %70 : vector<8x1xf32>
      %77 = arith.subf %75, %76 : vector<8x1xf32>
      %78 = vector.broadcast %70 : vector<8x1xf32> to vector<8x32xf32>
      %79 = arith.subf %66, %78 : vector<8x32xf32>
      %cst_62 = arith.constant 9.99999974E-6 : f32
      %80 = vector.broadcast %cst_62 : f32 to vector<8x1xf32>
      %81 = arith.addf %77, %80 : vector<8x1xf32>
      %82 = math.rsqrt %81 : vector<8x1xf32>
      %83 = vector.broadcast %82 : vector<8x1xf32> to vector<8x32xf32>
      %84 = arith.mulf %79, %83 : vector<8x32xf32>
      %c0_63 = arith.constant 0 : index
      %c0_64 = arith.constant 0 : index
      %85 = vector.load %arg13[%c0_63, %c0_64] : memref<1x32xf32, #tpu.memory_space<vmem>>, vector<1x32xf32>
      %86 = vector.broadcast %85 : vector<1x32xf32> to vector<8x32xf32>
      %87 = arith.mulf %84, %86 : vector<8x32xf32>
      %c0_65 = arith.constant 0 : index
      %c0_66 = arith.constant 0 : index
      %88 = vector.load %arg14[%c0_65, %c0_66] : memref<1x32xf32, #tpu.memory_space<vmem>>, vector<1x32xf32>
      %89 = vector.broadcast %88 : vector<1x32xf32> to vector<8x32xf32>
      %90 = arith.addf %87, %89 : vector<8x32xf32>
      %cst_67 = arith.constant 0.000000e+00 : f32
      %91 = vector.broadcast %cst_67 : f32 to vector<8x32xf32>
      %92 = arith.maximumf %90, %91 : vector<8x32xf32>
      %93 = arith.addf %60, %92 : vector<8x32xf32>
      %94 = arith.index_cast %31 : i32 to index
      %c0_68 = arith.constant 0 : index
      %95 = vector.load %arg23[%94, %c0_68] : memref<32x32xf32, #tpu.memory_space<vmem>>, vector<8x32xf32>
      tpu.vector_store %arg23[%94, %c0_68], %93 {strides = array<i32>} : memref<32x32xf32, #tpu.memory_space<vmem>>, vector<8x32xf32>,
      scf.yield %50 : vector<8x16xf32>
    }
    %c4_i32_21 = arith.constant 4 : i32
    %c0_22 = arith.constant 0 : index
    %c0_23 = arith.constant 0 : index
    %20 = vector.load %arg19[%c0_22, %c0_23] : memref<8x16xf32, #tpu.memory_space<vmem>>, vector<8x16xf32>
    tpu.vector_store %arg19[%c0_22, %c0_23], %19 {strides = array<i32>} : memref<8x16xf32, #tpu.memory_space<vmem>>, vector<8x16xf32>,
    %c0_24 = arith.constant 0 : index
    %c0_25 = arith.constant 0 : index
    %21 = vector.load %arg18[%c0_24, %c0_25] : memref<8x16xf32, #tpu.memory_space<vmem>>, vector<8x16xf32>
    tpu.vector_store %arg18[%c0_24, %c0_25], %19 {strides = array<i32>} : memref<8x16xf32, #tpu.memory_space<vmem>>, vector<8x16xf32>,
    %c0_26 = arith.constant 0 : index
    %c0_27 = arith.constant 0 : index
    %22 = vector.load %arg23[%c0_26, %c0_27] : memref<32x32xf32, #tpu.memory_space<vmem>>, vector<32x32xf32>
    %23 = arith.truncf %22 : vector<32x32xf32> to vector<32x32xbf16>
    %c0_28 = arith.constant 0 : index
    %c0_29 = arith.constant 0 : index
    %24 = vector.load %arg15[%c0_28, %c0_29] : memref<32x4xbf16, #tpu.memory_space<vmem>>, vector<32x4xbf16>
    %cst_30 = arith.constant dense<0.000000e+00> : vector<32x4xf32>
    %25 = tpu.matmul %23, %24, %cst_30 {dimension_numbers = #tpu.dot_dimension_numbers<[1], [0], [0], [1], [0, 0, 1, 1], [], []>} : vector<32x32xbf16>, vector<32x4xbf16>, vector<32x4xf32> -> vector<32x4xf32>
    %c0_31 = arith.constant 0 : index
    %c0_32 = arith.constant 0 : index
    %26 = vector.load %arg16[%c0_31, %c0_32] : memref<1x4xf32, #tpu.memory_space<vmem>>, vector<1x4xf32>
    %27 = vector.broadcast %26 : vector<1x4xf32> to vector<32x4xf32>
    %28 = arith.addf %25, %27 : vector<32x4xf32>
    %c0_33 = arith.constant 0 : index
    %c0_34 = arith.constant 0 : index
    %29 = vector.load %arg17[%c0_33, %c0_34] : memref<32x4xf32, #tpu.memory_space<vmem>>, vector<32x4xf32>
    tpu.vector_store %arg17[%c0_33, %c0_34], %28 {strides = array<i32>} : memref<32x4xf32, #tpu.memory_space<vmem>>, vector<32x4xf32>,
    return
  }
  func.func @transform_0(%arg0: i32) -> (i32, i32) {
    %c0_i32 = arith.constant 0 : i32
    %c0_i32_0 = arith.constant 0 : i32
    return %arg0, %c0_i32 : i32, i32
  }
  func.func @transform_1(%arg0: i32) -> (i32, i32) {
    %c0_i32 = arith.constant 0 : i32
    %c0_i32_0 = arith.constant 0 : i32
    %c0_i32_1 = arith.constant 0 : i32
    return %c0_i32, %c0_i32_0 : i32, i32
  }
  func.func @transform_2(%arg0: i32) -> (i32, i32) {
    %c0_i32 = arith.constant 0 : i32
    %c0_i32_0 = arith.constant 0 : i32
    %c0_i32_1 = arith.constant 0 : i32
    return %c0_i32, %c0_i32_0 : i32, i32
  }
  func.func @transform_3(%arg0: i32) -> (i32, i32) {
    %c0_i32 = arith.constant 0 : i32
    %c0_i32_0 = arith.constant 0 : i32
    %c0_i32_1 = arith.constant 0 : i32
    return %c0_i32, %c0_i32_0 : i32, i32
  }
  func.func @transform_4(%arg0: i32) -> (i32, i32) {
    %c0_i32 = arith.constant 0 : i32
    %c0_i32_0 = arith.constant 0 : i32
    %c0_i32_1 = arith.constant 0 : i32
    return %c0_i32, %c0_i32_0 : i32, i32
  }
  func.func @transform_5(%arg0: i32) -> (i32, i32) {
    %c0_i32 = arith.constant 0 : i32
    %c0_i32_0 = arith.constant 0 : i32
    %c0_i32_1 = arith.constant 0 : i32
    return %c0_i32, %c0_i32_0 : i32, i32
  }
  func.func @transform_6(%arg0: i32) -> (i32, i32) {
    %c0_i32 = arith.constant 0 : i32
    %c0_i32_0 = arith.constant 0 : i32
    %c0_i32_1 = arith.constant 0 : i32
    return %c0_i32, %c0_i32_0 : i32, i32
  }
  func.func @transform_7(%arg0: i32) -> (i32, i32) {
    %c0_i32 = arith.constant 0 : i32
    %c0_i32_0 = arith.constant 0 : i32
    %c0_i32_1 = arith.constant 0 : i32
    return %c0_i32, %c0_i32_0 : i32, i32
  }
  func.func @transform_8(%arg0: i32) -> (i32, i32) {
    %c0_i32 = arith.constant 0 : i32
    %c0_i32_0 = arith.constant 0 : i32
    %c0_i32_1 = arith.constant 0 : i32
    return %c0_i32, %c0_i32_0 : i32, i32
  }
  func.func @transform_9(%arg0: i32) -> (i32, i32) {
    %c0_i32 = arith.constant 0 : i32
    %c0_i32_0 = arith.constant 0 : i32
    %c0_i32_1 = arith.constant 0 : i32
    return %c0_i32, %c0_i32_0 : i32, i32
  }
  func.func @transform_10(%arg0: i32) -> (i32, i32) {
    %c0_i32 = arith.constant 0 : i32
    %c0_i32_0 = arith.constant 0 : i32
    %c0_i32_1 = arith.constant 0 : i32
    return %c0_i32, %c0_i32_0 : i32, i32
  }
  func.func @transform_11(%arg0: i32) -> (i32, i32) {
    %c0_i32 = arith.constant 0 : i32
    %c0_i32_0 = arith.constant 0 : i32
    %c0_i32_1 = arith.constant 0 : i32
    return %c0_i32, %c0_i32_0 : i32, i32
  }
  func.func @transform_12(%arg0: i32) -> (i32, i32) {
    %c0_i32 = arith.constant 0 : i32
    %c0_i32_0 = arith.constant 0 : i32
    %c0_i32_1 = arith.constant 0 : i32
    return %c0_i32, %c0_i32_0 : i32, i32
  }
  func.func @transform_13(%arg0: i32) -> (i32, i32) {
    %c0_i32 = arith.constant 0 : i32
    %c0_i32_0 = arith.constant 0 : i32
    %c0_i32_1 = arith.constant 0 : i32
    return %c0_i32, %c0_i32_0 : i32, i32
  }
  func.func @transform_14(%arg0: i32) -> (i32, i32) {
    %c0_i32 = arith.constant 0 : i32
    %c0_i32_0 = arith.constant 0 : i32
    %c0_i32_1 = arith.constant 0 : i32
    return %c0_i32, %c0_i32_0 : i32, i32
  }
  func.func @transform_15(%arg0: i32) -> (i32, i32) {
    %c0_i32 = arith.constant 0 : i32
    %c0_i32_0 = arith.constant 0 : i32
    %c0_i32_1 = arith.constant 0 : i32
    return %c0_i32, %c0_i32_0 : i32, i32
  }
  func.func @transform_16(%arg0: i32) -> (i32, i32) {
    %c0_i32 = arith.constant 0 : i32
    %c0_i32_0 = arith.constant 0 : i32
    return %arg0, %c0_i32 : i32, i32
  }
  func.func @transform_17(%arg0: i32) -> (i32, i32) {
    %c0_i32 = arith.constant 0 : i32
    %c0_i32_0 = arith.constant 0 : i32
    %c0_i32_1 = arith.constant 0 : i32
    return %c0_i32, %c0_i32_0 : i32, i32
  }
}

</mosaic_0001>

<llo_original>
// kernel: tpu_custom_call.1
$region0: #{tpu_custom_call.1}
  #allocation0 [shape = 'u32[]', space=smem, size = 0x4, offset = 0x4, fixed_abs, tag = 'smem constant byte address 0x4 - core index']
  #allocation1 [shape = 'u32[144,128]{1,0:T(1,128)}', space=vmem, size = 0x12000, scoped, tag = 'internal scratch']
  #allocation2 [shape = 'f32[8,16]{1,0:T(8,128)}', space=vmem, size = 0x1000, scoped, tag = 'scratch operand']
  #allocation3 [shape = 'f32[32,16]{1,0:T(8,128)}', space=vmem, size = 0x4000, scoped, tag = 'scratch operand']
  #allocation4 [shape = 'f32[32,32]{1,0:T(8,128)}', space=vmem, size = 0x4000, scoped, tag = 'scratch operand']
  #allocation5 [shape = 'f32[32,128]{1,0:T(8,128)}', space=vmem, size = 0x4000, scoped, tag = 'scratch operand']
  #allocation6 [shape = 'f32[32,32]{1,0:T(8,128)}', space=vmem, size = 0x4000, scoped, tag = 'scratch operand']
  %s0 = inlined_call_operand.vmem [shape: f32[64,8], index: 0, kind: input, shape index: {}]
  %s1 = inlined_call_operand.vmem [shape: f32[8,16], index: 1, kind: input, shape index: {}]
  %s2 = inlined_call_operand.vmem [shape: bf16[16,128], index: 2, kind: input, shape index: {}]
  %s3 = inlined_call_operand.vmem [shape: bf16[8,128], index: 3, kind: input, shape index: {}]
  %s4 = inlined_call_operand.vmem [shape: f32[16,16], index: 4, kind: input, shape index: {}]
  %s5 = inlined_call_operand.vmem [shape: f32[1,16], index: 5, kind: input, shape index: {}]
  %s6 = inlined_call_operand.vmem [shape: bf16[8,16], index: 6, kind: input, shape index: {}]
  %s7 = inlined_call_operand.vmem [shape: f32[1,16], index: 7, kind: input, shape index: {}]
  %s8 = inlined_call_operand.vmem [shape: bf16[128,32], index: 8, kind: input, shape index: {}]
  %s9 = inlined_call_operand.vmem [shape: bf16[8,32], index: 9, kind: input, shape index: {}]
  %s10 = inlined_call_operand.vmem [shape: bf16[32,32], index: 10, kind: input, shape index: {}]
  %s11 = inlined_call_operand.vmem [shape: f32[1,32], index: 11, kind: input, shape index: {}]
  %s12 = inlined_call_operand.vmem [shape: f32[1,32], index: 12, kind: input, shape index: {}]
  %s13 = inlined_call_operand.vmem [shape: f32[1,32], index: 13, kind: input, shape index: {}]
  %s14 = inlined_call_operand.vmem [shape: bf16[32,4], index: 14, kind: input, shape index: {}]
  %s15 = inlined_call_operand.vmem [shape: f32[1,4], index: 15, kind: input, shape index: {}]
  %s16 = inlined_call_operand.vmem [shape: f32[64,4], index: 16, kind: output, shape index: {0}]
  %s17 = inlined_call_operand.hbm [shape: f32[8,16], index: 17, kind: output, shape index: {1}]
  %18 = xla_tuple %s16, %s17
  %s19 = sld [smem:[#allocation0]]
  $region116: #{tpu_custom_call.1} parent=0
    _
  %s21 = ssub.s32 1, %s19
  %s22 = scalar_select 0, %s21, %s19
  $region1: #{tpu_custom_call.1} parent=0
    #allocation7 [shape = 'u8[4096]{0}', space=vmem, size = 0x1000, scoped, tag = 'output window, operand 1, single buffered']
    #allocation8 [shape = 's32[2]{0}', space=sflag, size = 0x8, scoped, tag = 'scoped memory for tpu_custom_call.1']
    %23 = vsyncpa [#allocation8], 0
    loop: start=0, step=1, limit=4
    $region2: #{tpu_custom_call.1} parent=1 // loop_pre_header
      _
    $region3: #{tpu_custom_call.1} parent=1 // loop_header
      %s25 = sphi 0, %s29
      %p26 = scmp.ge.s32.totalorder %s25, 4
      %s35 = sphi 0, %s37
      %s38 = sphi 0, %s35
      %s39 = sphi 0, %s38
      %s55 = sphi 0, %s39
      %s59 = sphi 0, %s59
      %s61 = sphi 0, %s59
      %s62 = sphi 0, %s61
      %s76 = sphi 0, %s62
      %s80 = sphi 0, %s80
      %s82 = sphi 0, %s80
      %s83 = sphi 0, %s82
      %s97 = sphi 0, %s83
      %s101 = sphi 0, %s101
      %s103 = sphi 0, %s101
      %s104 = sphi 0, %s103
      %s118 = sphi 0, %s104
      %s122 = sphi 0, %s122
      %s124 = sphi 0, %s122
      %s125 = sphi 0, %s124
      %s139 = sphi 0, %s125
      %s143 = sphi 0, %s143
      %s145 = sphi 0, %s143
      %s146 = sphi 0, %s145
      %s160 = sphi 0, %s146
      %s164 = sphi 0, %s164
      %s166 = sphi 0, %s164
      %s167 = sphi 0, %s166
      %s181 = sphi 0, %s167
      %s185 = sphi 0, %s185
      %s187 = sphi 0, %s185
      %s188 = sphi 0, %s187
      %s202 = sphi 0, %s188
      %s206 = sphi 0, %s206
      %s208 = sphi 0, %s206
      %s209 = sphi 0, %s208
      %s223 = sphi 0, %s209
      %s227 = sphi 0, %s227
      %s229 = sphi 0, %s227
      %s230 = sphi 0, %s229
      %s244 = sphi 0, %s230
      %s248 = sphi 0, %s248
      %s250 = sphi 0, %s248
      %s251 = sphi 0, %s250
      %s265 = sphi 0, %s251
      %s269 = sphi 0, %s269
      %s271 = sphi 0, %s269
      %s272 = sphi 0, %s271
      %s286 = sphi 0, %s272
      %s290 = sphi 0, %s290
      %s292 = sphi 0, %s290
      %s293 = sphi 0, %s292
      %s307 = sphi 0, %s293
      %s311 = sphi 0, %s311
      %s313 = sphi 0, %s311
      %s314 = sphi 0, %s313
      %s328 = sphi 0, %s314
      %s332 = sphi 0, %s332
      %s334 = sphi 0, %s332
      %s335 = sphi 0, %s334
      %s349 = sphi 0, %s335
      %s353 = sphi 0, %s353
      %s355 = sphi 0, %s353
      %s356 = sphi 0, %s355
      %s370 = sphi 0, %s356
      %s376 = sphi 0, %s378
      %s379 = sphi 0, %s376
      %s380 = sphi 0, %s379
      %s396 = sphi 0, %s380
      %s400 = sphi 0, %s400
      %s402 = sphi 0, %s400
      %s403 = sphi 0, %s402
      %s417 = sphi 0, %s403
    $region4: #{tpu_custom_call.1} parent=1 // loop_header_branch
      %28 = sbr.rel (%p26) target = $region8
    $region5: #{tpu_custom_call.1} parent=1 // loop_body
      %s30 = ssub.s32 %s25, 1
      %s31 = ssub.s32 %s25, 2
      %s32 = sadd.s32 %s25, 1
      %s33 = ssub.s32 %s25, %s32
      %p34 = scmp.eq.s32.totalorder %s33, 0
      %s36 = sadd.s32 %s35, 1
      %s37 = scalar_select %p34, %s35, %s36
      %p40 = pneg %p34
      %p41 = scmp.eq.s32.totalorder %s25, 1
      %p42 = por %p40, %p41
      %p43 = scmp.ne.s32.totalorder %s35, %s38
      %p44 = scmp.eq.s32.totalorder %s25, 0
      %p45 = por %p43, %p44
      %p46 = scmp.ne.s32.totalorder %s35, %s38
      %p47 = scmp.eq.s32.totalorder %s30, 1
      %p48 = por %p46, %p47
      %p49 = scmp.ne.s32.totalorder %s38, %s39
      %p50 = scmp.eq.s32.totalorder %s30, 0
      %p51 = por %p49, %p50
      %p52 = scmp.ne.s32.totalorder %s38, %s39
      %p53 = scmp.eq.s32.totalorder %s31, 1
      %p54 = por %p52, %p53
      %p56 = scmp.ne.s32.totalorder %s39, %s55
      %p57 = scmp.eq.s32.totalorder %s31, 0
      %p58 = por %p56, %p57
      %s60 = sadd.s32 %s59, 1
      %p63 = scmp.eq.s32.totalorder %s25, 1
      %p64 = scmp.ne.s32.totalorder %s59, %s61
      %p65 = scmp.eq.s32.totalorder %s25, 0
      %p66 = por %p64, %p65
      %p67 = scmp.ne.s32.totalorder %s59, %s61
      %p68 = scmp.eq.s32.totalorder %s30, 1
      %p69 = por %p67, %p68
      %p70 = scmp.ne.s32.totalorder %s61, %s62
      %p71 = scmp.eq.s32.totalorder %s30, 0
      %p72 = por %p70, %p71
      %p73 = scmp.ne.s32.totalorder %s61, %s62
      %p74 = scmp.eq.s32.totalorder %s31, 1
      %p75 = por %p73, %p74
      %p77 = scmp.ne.s32.totalorder %s62, %s76
      %p78 = scmp.eq.s32.totalorder %s31, 0
      %p79 = por %p77, %p78
      %s81 = sadd.s32 %s80, 1
      %p84 = scmp.eq.s32.totalorder %s25, 1
      %p85 = scmp.ne.s32.totalorder %s80, %s82
      %p86 = scmp.eq.s32.totalorder %s25, 0
      %p87 = por %p85, %p86
      %p88 = scmp.ne.s32.totalorder %s80, %s82
      %p89 = scmp.eq.s32.totalorder %s30, 1
      %p90 = por %p88, %p89
      %p91 = scmp.ne.s32.totalorder %s82, %s83
      %p92 = scmp.eq.s32.totalorder %s30, 0
      %p93 = por %p91, %p92
      %p94 = scmp.ne.s32.totalorder %s82, %s83
      %p95 = scmp.eq.s32.totalorder %s31, 1
      %p96 = por %p94, %p95
      %p98 = scmp.ne.s32.totalorder %s83, %s97
      %p99 = scmp.eq.s32.totalorder %s31, 0
      %p100 = por %p98, %p99
      %s102 = sadd.s32 %s101, 1
      %p105 = scmp.eq.s32.totalorder %s25, 1
      %p106 = scmp.ne.s32.totalorder %s101, %s103
      %p107 = scmp.eq.s32.totalorder %s25, 0
      %p108 = por %p106, %p107
      %p109 = scmp.ne.s32.totalorder %s101, %s103
      %p110 = scmp.eq.s32.totalorder %s30, 1
      %p111 = por %p109, %p110
      %p112 = scmp.ne.s32.totalorder %s103, %s104
      %p113 = scmp.eq.s32.totalorder %s30, 0
      %p114 = por %p112, %p113
      %p115 = scmp.ne.s32.totalorder %s103, %s104
      %p116 = scmp.eq.s32.totalorder %s31, 1
      %p117 = por %p115, %p116
      %p119 = scmp.ne.s32.totalorder %s104, %s118
      %p120 = scmp.eq.s32.totalorder %s31, 0
      %p121 = por %p119, %p120
      %s123 = sadd.s32 %s122, 1
      %p126 = scmp.eq.s32.totalorder %s25, 1
      %p127 = scmp.ne.s32.totalorder %s122, %s124
      %p128 = scmp.eq.s32.totalorder %s25, 0
      %p129 = por %p127, %p128
      %p130 = scmp.ne.s32.totalorder %s122, %s124
      %p131 = scmp.eq.s32.totalorder %s30, 1
      %p132 = por %p130, %p131
      %p133 = scmp.ne.s32.totalorder %s124, %s125
      %p134 = scmp.eq.s32.totalorder %s30, 0
      %p135 = por %p133, %p134
      %p136 = scmp.ne.s32.totalorder %s124, %s125
      %p137 = scmp.eq.s32.totalorder %s31, 1
      %p138 = por %p136, %p137
      %p140 = scmp.ne.s32.totalorder %s125, %s139
      %p141 = scmp.eq.s32.totalorder %s31, 0
      %p142 = por %p140, %p141
      %s144 = sadd.s32 %s143, 1
      %p147 = scmp.eq.s32.totalorder %s25, 1
      %p148 = scmp.ne.s32.totalorder %s143, %s145
      %p149 = scmp.eq.s32.totalorder %s25, 0
      %p150 = por %p148, %p149
      %p151 = scmp.ne.s32.totalorder %s143, %s145
      %p152 = scmp.eq.s32.totalorder %s30, 1
      %p153 = por %p151, %p152
      %p154 = scmp.ne.s32.totalorder %s145, %s146
      %p155 = scmp.eq.s32.totalorder %s30, 0
      %p156 = por %p154, %p155
      %p157 = scmp.ne.s32.totalorder %s145, %s146
      %p158 = scmp.eq.s32.totalorder %s31, 1
      %p159 = por %p157, %p158
      %p161 = scmp.ne.s32.totalorder %s146, %s160
      %p162 = scmp.eq.s32.totalorder %s31, 0
      %p163 = por %p161, %p162
      %s165 = sadd.s32 %s164, 1
      %p168 = scmp.eq.s32.totalorder %s25, 1
      %p169 = scmp.ne.s32.totalorder %s164, %s166
      %p170 = scmp.eq.s32.totalorder %s25, 0
      %p171 = por %p169, %p170
      %p172 = scmp.ne.s32.totalorder %s164, %s166
      %p173 = scmp.eq.s32.totalorder %s30, 1
      %p174 = por %p172, %p173
      %p175 = scmp.ne.s32.totalorder %s166, %s167
      %p176 = scmp.eq.s32.totalorder %s30, 0
      %p177 = por %p175, %p176
      %p178 = scmp.ne.s32.totalorder %s166, %s167
      %p179 = scmp.eq.s32.totalorder %s31, 1
      %p180 = por %p178, %p179
      %p182 = scmp.ne.s32.totalorder %s167, %s181
      %p183 = scmp.eq.s32.totalorder %s31, 0
      %p184 = por %p182, %p183
      %s186 = sadd.s32 %s185, 1
      %p189 = scmp.eq.s32.totalorder %s25, 1
      %p190 = scmp.ne.s32.totalorder %s185, %s187
      %p191 = scmp.eq.s32.totalorder %s25, 0
      %p192 = por %p190, %p191
      %p193 = scmp.ne.s32.totalorder %s185, %s187
      %p194 = scmp.eq.s32.totalorder %s30, 1
      %p195 = por %p193, %p194
      %p196 = scmp.ne.s32.totalorder %s187, %s188
      %p197 = scmp.eq.s32.totalorder %s30, 0
      %p198 = por %p196, %p197
      %p199 = scmp.ne.s32.totalorder %s187, %s188
      %p200 = scmp.eq.s32.totalorder %s31, 1
      %p201 = por %p199, %p200
      %p203 = scmp.ne.s32.totalorder %s188, %s202
      %p204 = scmp.eq.s32.totalorder %s31, 0
      %p205 = por %p203, %p204
      %s207 = sadd.s32 %s206, 1
      %p210 = scmp.eq.s32.totalorder %s25, 1
      %p211 = scmp.ne.s32.totalorder %s206, %s208
      %p212 = scmp.eq.s32.totalorder %s25, 0
      %p213 = por %p211, %p212
      %p214 = scmp.ne.s32.totalorder %s206, %s208
      %p215 = scmp.eq.s32.totalorder %s30, 1
      %p216 = por %p214, %p215
      %p217 = scmp.ne.s32.totalorder %s208, %s209
      %p218 = scmp.eq.s32.totalorder %s30, 0
      %p219 = por %p217, %p218
      %p220 = scmp.ne.s32.totalorder %s208, %s209
      %p221 = scmp.eq.s32.totalorder %s31, 1
      %p222 = por %p220, %p221
      %p224 = scmp.ne.s32.totalorder %s209, %s223
      %p225 = scmp.eq.s32.totalorder %s31, 0
      %p226 = por %p224, %p225
      %s228 = sadd.s32 %s227, 1
      %p231 = scmp.eq.s32.totalorder %s25, 1
      %p232 = scmp.ne.s32.totalorder %s227, %s229
      %p233 = scmp.eq.s32.totalorder %s25, 0
      %p234 = por %p232, %p233
      %p235 = scmp.ne.s32.totalorder %s227, %s229
      %p236 = scmp.eq.s32.totalorder %s30, 1
      %p237 = por %p235, %p236
      %p238 = scmp.ne.s32.totalorder %s229, %s230
      %p239 = scmp.eq.s32.totalorder %s30, 0
      %p240 = por %p238, %p239
      %p241 = scmp.ne.s32.totalorder %s229, %s230
      %p242 = scmp.eq.s32.totalorder %s31, 1
      %p243 = por %p241, %p242
      %p245 = scmp.ne.s32.totalorder %s230, %s244
      %p246 = scmp.eq.s32.totalorder %s31, 0
      %p247 = por %p245, %p246
      %s249 = sadd.s32 %s248, 1
      %p252 = scmp.eq.s32.totalorder %s25, 1
      %p253 = scmp.ne.s32.totalorder %s248, %s250
      %p254 = scmp.eq.s32.totalorder %s25, 0
      %p255 = por %p253, %p254
      %p256 = scmp.ne.s32.totalorder %s248, %s250
      %p257 = scmp.eq.s32.totalorder %s30, 1
      %p258 = por %p256, %p257
      %p259 = scmp.ne.s32.totalorder %s250, %s251
      %p260 = scmp.eq.s32.totalorder %s30, 0
      %p261 = por %p259, %p260
      %p262 = scmp.ne.s32.totalorder %s250, %s251
      %p263 = scmp.eq.s32.totalorder %s31, 1
      %p264 = por %p262, %p263
      %p266 = scmp.ne.s32.totalorder %s251, %s265
      %p267 = scmp.eq.s32.totalorder %s31, 0
      %p268 = por %p266, %p267
      %s270 = sadd.s32 %s269, 1
      %p273 = scmp.eq.s32.totalorder %s25, 1
      %p274 = scmp.ne.s32.totalorder %s269, %s271
      %p275 = scmp.eq.s32.totalorder %s25, 0
      %p276 = por %p274, %p275
      %p277 = scmp.ne.s32.totalorder %s269, %s271
      %p278 = scmp.eq.s32.totalorder %s30, 1
      %p279 = por %p277, %p278
      %p280 = scmp.ne.s32.totalorder %s271, %s272
      %p281 = scmp.eq.s32.totalorder %s30, 0
      %p282 = por %p280, %p281
      %p283 = scmp.ne.s32.totalorder %s271, %s272
      %p284 = scmp.eq.s32.totalorder %s31, 1
      %p285 = por %p283, %p284
      %p287 = scmp.ne.s32.totalorder %s272, %s286
      %p288 = scmp.eq.s32.totalorder %s31, 0
      %p289 = por %p287, %p288
      %s291 = sadd.s32 %s290, 1
      %p294 = scmp.eq.s32.totalorder %s25, 1
      %p295 = scmp.ne.s32.totalorder %s290, %s292
      %p296 = scmp.eq.s32.totalorder %s25, 0
      %p297 = por %p295, %p296
      %p298 = scmp.ne.s32.totalorder %s290, %s292
      %p299 = scmp.eq.s32.totalorder %s30, 1
      %p300 = por %p298, %p299
      %p301 = scmp.ne.s32.totalorder %s292, %s293
      %p302 = scmp.eq.s32.totalorder %s30, 0
      %p303 = por %p301, %p302
      %p304 = scmp.ne.s32.totalorder %s292, %s293
      %p305 = scmp.eq.s32.totalorder %s31, 1
      %p306 = por %p304, %p305
      %p308 = scmp.ne.s32.totalorder %s293, %s307
      %p309 = scmp.eq.s32.totalorder %s31, 0
      %p310 = por %p308, %p309
      %s312 = sadd.s32 %s311, 1
      %p315 = scmp.eq.s32.totalorder %s25, 1
      %p316 = scmp.ne.s32.totalorder %s311, %s313
      %p317 = scmp.eq.s32.totalorder %s25, 0
      %p318 = por %p316, %p317
      %p319 = scmp.ne.s32.totalorder %s311, %s313
      %p320 = scmp.eq.s32.totalorder %s30, 1
      %p321 = por %p319, %p320
      %p322 = scmp.ne.s32.totalorder %s313, %s314
      %p323 = scmp.eq.s32.totalorder %s30, 0
      %p324 = por %p322, %p323
      %p325 = scmp.ne.s32.totalorder %s313, %s314
      %p326 = scmp.eq.s32.totalorder %s31, 1
      %p327 = por %p325, %p326
      %p329 = scmp.ne.s32.totalorder %s314, %s328
      %p330 = scmp.eq.s32.totalorder %s31, 0
      %p331 = por %p329, %p330
      %s333 = sadd.s32 %s332, 1
      %p336 = scmp.eq.s32.totalorder %s25, 1
      %p337 = scmp.ne.s32.totalorder %s332, %s334
      %p338 = scmp.eq.s32.totalorder %s25, 0
      %p339 = por %p337, %p338
      %p340 = scmp.ne.s32.totalorder %s332, %s334
      %p341 = scmp.eq.s32.totalorder %s30, 1
      %p342 = por %p340, %p341
      %p343 = scmp.ne.s32.totalorder %s334, %s335
      %p344 = scmp.eq.s32.totalorder %s30, 0
      %p345 = por %p343, %p344
      %p346 = scmp.ne.s32.totalorder %s334, %s335
      %p347 = scmp.eq.s32.totalorder %s31, 1
      %p348 = por %p346, %p347
      %p350 = scmp.ne.s32.totalorder %s335, %s349
      %p351 = scmp.eq.s32.totalorder %s31, 0
      %p352 = por %p350, %p351
      %s354 = sadd.s32 %s353, 1
      %p357 = scmp.eq.s32.totalorder %s25, 1
      %p358 = scmp.ne.s32.totalorder %s353, %s355
      %p359 = scmp.eq.s32.totalorder %s25, 0
      %p360 = por %p358, %p359
      %p361 = scmp.ne.s32.totalorder %s353, %s355
      %p362 = scmp.eq.s32.totalorder %s30, 1
      %p363 = por %p361, %p362
      %p364 = scmp.ne.s32.totalorder %s355, %s356
      %p365 = scmp.eq.s32.totalorder %s30, 0
      %p366 = por %p364, %p365
      %p367 = scmp.ne.s32.totalorder %s355, %s356
      %p368 = scmp.eq.s32.totalorder %s31, 1
      %p369 = por %p367, %p368
      %p371 = scmp.ne.s32.totalorder %s356, %s370
      %p372 = scmp.eq.s32.totalorder %s31, 0
      %p373 = por %p371, %p372
      %s374 = ssub.s32 %s25, %s32
      %p375 = scmp.eq.s32.totalorder %s374, 0
      %s377 = sadd.s32 %s376, 1
      %s378 = scalar_select %p375, %s376, %s377
      %p381 = pneg %p375
      %p382 = scmp.eq.s32.totalorder %s25, 1
      %p383 = por %p381, %p382
      %p384 = scmp.ne.s32.totalorder %s376, %s379
      %p385 = scmp.eq.s32.totalorder %s25, 0
      %p386 = por %p384, %p385
      %p387 = scmp.ne.s32.totalorder %s376, %s379
      %p388 = scmp.eq.s32.totalorder %s30, 1
      %p389 = por %p387, %p388
      %p390 = scmp.ne.s32.totalorder %s379, %s380
      %p391 = scmp.eq.s32.totalorder %s30, 0
      %p392 = por %p390, %p391
      %p393 = scmp.ne.s32.totalorder %s379, %s380
      %p394 = scmp.eq.s32.totalorder %s31, 1
      %p395 = por %p393, %p394
      %p397 = scmp.ne.s32.totalorder %s380, %s396
      %p398 = scmp.eq.s32.totalorder %s31, 0
      %p399 = por %p397, %p398
      %s401 = sadd.s32 %s400, 1
      %p404 = scmp.eq.s32.totalorder %s25, 1
      %p405 = scmp.ne.s32.totalorder %s400, %s402
      %p406 = scmp.eq.s32.totalorder %s25, 0
      %p407 = por %p405, %p406
      %p408 = scmp.ne.s32.totalorder %s400, %s402
      %p409 = scmp.eq.s32.totalorder %s30, 1
      %p410 = por %p408, %p409
      %p411 = scmp.ne.s32.totalorder %s402, %s403
      %p412 = scmp.eq.s32.totalorder %s30, 0
      %p413 = por %p411, %p412
      %p414 = scmp.ne.s32.totalorder %s402, %s403
      %p415 = scmp.eq.s32.totalorder %s31, 1
      %p416 = por %p414, %p415
      %p418 = scmp.ne.s32.totalorder %s403, %s417
      %p419 = scmp.eq.s32.totalorder %s31, 0
      %p420 = por %p418, %p419
      %p421 = scmp.le.s32.totalorder 1, %s25
      %p422 = scmp.lt.s32.totalorder %s25, 3
      %p423 = pnand %p421, %p422
      %p424 = pneg %p423
      // Predicated region
      $region9: #{tpu_custom_call.1} parent=5 // pred_check
        _
      $region10: #{tpu_custom_call.1} parent=5 // pred_check_branch
        %426 = sbr.rel (%p423) target = $region12
      $region11: #{tpu_custom_call.1} parent=5 // pred_region
        %s427 = ssub.s32 %s25, 1
        // Predicated region
        $region13: #{tpu_custom_call.1} parent=11 // pred_check
          %p428 = pneg %p72
        $region14: #{tpu_custom_call.1} parent=11 // pred_check_branch
          %430 = sbr.rel (%p428) target = $region16
        $region15: #{tpu_custom_call.1} parent=11 // pred_region
          _
        $region16: #{tpu_custom_call.1} parent=11 // pred_fallthru
          _
        // Predicated region
        $region17: #{tpu_custom_call.1} parent=11 // pred_check
          %p431 = pneg %p93
        $region18: #{tpu_custom_call.1} parent=11 // pred_check_branch
          %433 = sbr.rel (%p431) target = $region20
        $region19: #{tpu_custom_call.1} parent=11 // pred_region
          _
        $region20: #{tpu_custom_call.1} parent=11 // pred_fallthru
          _
        // Predicated region
        $region21: #{tpu_custom_call.1} parent=11 // pred_check
          %p434 = pneg %p114
        $region22: #{tpu_custom_call.1} parent=11 // pred_check_branch
          %436 = sbr.rel (%p434) target = $region24
        $region23: #{tpu_custom_call.1} parent=11 // pred_region
          _
        $region24: #{tpu_custom_call.1} parent=11 // pred_fallthru
          _
        // Predicated region
        $region25: #{tpu_custom_call.1} parent=11 // pred_check
          %p437 = pneg %p135
        $region26: #{tpu_custom_call.1} parent=11 // pred_check_branch
          %439 = sbr.rel (%p437) target = $region28
        $region27: #{tpu_custom_call.1} parent=11 // pred_region
          _
        $region28: #{tpu_custom_call.1} parent=11 // pred_fallthru
          _
        // Predicated region
        $region29: #{tpu_custom_call.1} parent=11 // pred_check
          %p440 = pneg %p156
        $region30: #{tpu_custom_call.1} parent=11 // pred_check_branch
          %442 = sbr.rel (%p440) target = $region32
        $region31: #{tpu_custom_call.1} parent=11 // pred_region
          _
        $region32: #{tpu_custom_call.1} parent=11 // pred_fallthru
          _
        // Predicated region
        $region33: #{tpu_custom_call.1} parent=11 // pred_check
          %p443 = pneg %p177
        $region34: #{tpu_custom_call.1} parent=11 // pred_check_branch
          %445 = sbr.rel (%p443) target = $region36
        $region35: #{tpu_custom_call.1} parent=11 // pred_region
          _
        $region36: #{tpu_custom_call.1} parent=11 // pred_fallthru
          _
        // Predicated region
        $region37: #{tpu_custom_call.1} parent=11 // pred_check
          %p446 = pneg %p198
        $region38: #{tpu_custom_call.1} parent=11 // pred_check_branch
          %448 = sbr.rel (%p446) target = $region40
        $region39: #{tpu_custom_call.1} parent=11 // pred_region
          _
        $region40: #{tpu_custom_call.1} parent=11 // pred_fallthru
          _
        // Predicated region
        $region41: #{tpu_custom_call.1} parent=11 // pred_check
          %p449 = pneg %p219
        $region42: #{tpu_custom_call.1} parent=11 // pred_check_branch
          %451 = sbr.rel (%p449) target = $region44
        $region43: #{tpu_custom_call.1} parent=11 // pred_region
          _
        $region44: #{tpu_custom_call.1} parent=11 // pred_fallthru
          _
        // Predicated region
        $region45: #{tpu_custom_call.1} parent=11 // pred_check
          %p452 = pneg %p240
        $region46: #{tpu_custom_call.1} parent=11 // pred_check_branch
          %454 = sbr.rel (%p452) target = $region48
        $region47: #{tpu_custom_call.1} parent=11 // pred_region
          _
        $region48: #{tpu_custom_call.1} parent=11 // pred_fallthru
          _
        // Predicated region
        $region49: #{tpu_custom_call.1} parent=11 // pred_check
          %p455 = pneg %p261
        $region50: #{tpu_custom_call.1} parent=11 // pred_check_branch
          %457 = sbr.rel (%p455) target = $region52
        $region51: #{tpu_custom_call.1} parent=11 // pred_region
          _
        $region52: #{tpu_custom_call.1} parent=11 // pred_fallthru
          _
        // Predicated region
        $region53: #{tpu_custom_call.1} parent=11 // pred_check
          %p458 = pneg %p282
        $region54: #{tpu_custom_call.1} parent=11 // pred_check_branch
          %460 = sbr.rel (%p458) target = $region56
        $region55: #{tpu_custom_call.1} parent=11 // pred_region
          _
        $region56: #{tpu_custom_call.1} parent=11 // pred_fallthru
          _
        // Predicated region
        $region57: #{tpu_custom_call.1} parent=11 // pred_check
          %p461 = pneg %p303
        $region58: #{tpu_custom_call.1} parent=11 // pred_check_branch
          %463 = sbr.rel (%p461) target = $region60
        $region59: #{tpu_custom_call.1} parent=11 // pred_region
          _
        $region60: #{tpu_custom_call.1} parent=11 // pred_fallthru
          _
        // Predicated region
        $region61: #{tpu_custom_call.1} parent=11 // pred_check
          %p464 = pneg %p324
        $region62: #{tpu_custom_call.1} parent=11 // pred_check_branch
          %466 = sbr.rel (%p464) target = $region64
        $region63: #{tpu_custom_call.1} parent=11 // pred_region
          _
        $region64: #{tpu_custom_call.1} parent=11 // pred_fallthru
          _
        // Predicated region
        $region65: #{tpu_custom_call.1} parent=11 // pred_check
          %p467 = pneg %p345
        $region66: #{tpu_custom_call.1} parent=11 // pred_check_branch
          %469 = sbr.rel (%p467) target = $region68
        $region67: #{tpu_custom_call.1} parent=11 // pred_region
          _
        $region68: #{tpu_custom_call.1} parent=11 // pred_fallthru
          _
        // Predicated region
        $region69: #{tpu_custom_call.1} parent=11 // pred_check
          %p470 = pneg %p366
        $region70: #{tpu_custom_call.1} parent=11 // pred_check_branch
          %472 = sbr.rel (%p470) target = $region72
        $region71: #{tpu_custom_call.1} parent=11 // pred_region
          _
        $region72: #{tpu_custom_call.1} parent=11 // pred_fallthru
          _
      $region12: #{tpu_custom_call.1} parent=5 // pred_fallthru
        _
      %p473 = scmp.lt.s32.totalorder %s25, 2
      // Predicated region
      $region73: #{tpu_custom_call.1} parent=5 // pred_check
        %p474 = pneg %p473
      $region74: #{tpu_custom_call.1} parent=5 // pred_check_branch
        %476 = sbr.rel (%p474) target = $region76
      $region75: #{tpu_custom_call.1} parent=5 // pred_region
        // Predicated region
        $region77: #{tpu_custom_call.1} parent=75 // pred_check
          %p477 = pneg %p45
        $region78: #{tpu_custom_call.1} parent=75 // pred_check_branch
          %479 = sbr.rel (%p477) target = $region80
        $region79: #{tpu_custom_call.1} parent=75 // pred_region
          %s480 = smul.u32 4, %s25
          %p481 = scmp.lt.s32.totalorder %s480, 7
          %s482 = scalar_select %p481, %s480, 7
          %s483 = smul.addr %s482, 8
          %s484 = scalar_lea.vmem %s0, %s483
          %s485 = smul.u32 4, %s25
        $region80: #{tpu_custom_call.1} parent=75 // pred_fallthru
          _
      $region76: #{tpu_custom_call.1} parent=5 // pred_fallthru
        _
      %p486 = scmp.le.s32.totalorder 1, %s25
      %p487 = scmp.lt.s32.totalorder %s25, 3
      %p488 = pnand %p486, %p487
      %p489 = pneg %p488
      // Predicated region
      $region81: #{tpu_custom_call.1} parent=5 // pred_check
        _
      $region82: #{tpu_custom_call.1} parent=5 // pred_check_branch
        %491 = sbr.rel (%p488) target = $region84
      $region83: #{tpu_custom_call.1} parent=5 // pred_region
        %s492 = ssub.s32 %s25, 1
        %s493 = smul.u32 4, %s30
        %p494 = scmp.lt.s32.totalorder %s493, 7
        %s495 = scalar_select %p494, %s493, 7
        %s496 = smul.addr %s495, 8
        %s497 = scalar_lea.vmem %s0, %s496
        %p498 = pneg %p51
        %p499 = pneg %p48
        %p500 = pneg %p72
        %p501 = pneg %p69
        %p502 = pneg %p93
        %p503 = pneg %p90
        %p504 = pneg %p114
        %p505 = pneg %p111
        %p506 = pneg %p135
        %p507 = pneg %p132
        %p508 = pneg %p156
        %p509 = pneg %p153
        %p510 = pneg %p177
        %p511 = pneg %p174
        %p512 = pneg %p198
        %p513 = pneg %p195
        %p514 = pneg %p219
        %p515 = pneg %p216
        %p516 = pneg %p240
        %p517 = pneg %p237
        %p518 = pneg %p261
        %p519 = pneg %p258
        %p520 = pneg %p282
        %p521 = pneg %p279
        %p522 = pneg %p303
        %p523 = pneg %p300
        %p524 = pneg %p324
        %p525 = pneg %p321
        %p526 = pneg %p345
        %p527 = pneg %p342
        %p528 = pneg %p366
        %p529 = pneg %p363
        %p530 = pneg %p392
        %p531 = pneg %p389
        %s532 = smul.u32 4, %s30
        %p533 = scmp.lt.s32.totalorder %s532, 7
        %s534 = scalar_select %p533, %s532, 7
        %s535 = smul.addr %s534, 8
        %s536 = scalar_lea.vmem %s16, %s535
        %p537 = pneg %p413
        %p538 = pneg %p410
        %s539 = smul.u32 4, %s30
        %p540 = scmp.lt.s32.totalorder %s539, 7
        %s541 = scalar_select %p540, %s539, 7
        %s542 = smul.addr %s541, 8
        %s543 = scalar_lea.vmem %s0, %s542
        %s544 = smul.u32 4, %s30
        %s545 = smul.u32 4, %s30
        %p546 = scmp.lt.s32.totalorder %s545, 7
        %s547 = scalar_select %p546, %s545, 7
        %s548 = smul.addr %s547, 8
        %s549 = scalar_lea.vmem %s16, %s548
        %s550 = smul.u32 4, %s30
        %p552 = scmp.eq.s32.totalorder %s30, 0
        // Predicated region
        $region85: #{tpu_custom_call.1} parent=83 // pred_check
          %p553 = pneg %p552
        $region86: #{tpu_custom_call.1} parent=83 // pred_check_branch
          %555 = sbr.rel (%p553) target = $region88
        $region87: #{tpu_custom_call.1} parent=83 // pred_region
          %v556 = vld [vmem:[%s1] sm:$0xff]
          %vm557 = vcmask 130048
          %558 = vst.msk [vmem:[#allocation2] sm:$0xff] %vm557, %v556
        $region88: #{tpu_custom_call.1} parent=83 // pred_fallthru
          _
        %v559 = vld [vmem:[%s543] sm:$0xff]
        %v560 = vld [vmem:[%s543 + $0x8] sm:$0xff]
        %v561 = vld [vmem:[%s543 + $0x10] sm:$0xff]
        %v562 = vld [vmem:[%s543 + $0x18] sm:$0xff]
        %v563 = vpack.c.bf16 %v560, %v559
        %v564 = vpack.c.bf16 %v562, %v561
        %v565 = vld [vmem:[%s6] sm:$0xf]
        %v566 = vld [vmem:[%s7] sm:$0x1]
        %v568 = vlaneseq
        %v569 = vshrl.u32 %v568, 7
        %v570 = vsub.s32 0, %v569
        %v571 = vrot.slane %v566, %v570
        %vm573 = vcmask 64512
        %v575 = vsel %vm573, %v563, 0
        %v578 = vsel %vm573, %v564, 0
        %vm580 = vcmask 1043456
        %v582 = vsel %vm580, %v565, 0
        %584 = vmatprep.subr.bf16.mxu0 0
        %585 = vmatpush1.bf16.msra.mxu0 %v582
        %586 = vmatprep.subr.bf16.mxu0 0
        %587 = vmatpush1.bf16.msra.mxu0 0
        %588 = vmatprep.subr.bf16.mxu0 0
        %589 = vmatpush1.bf16.msra.mxu0 0
        %590 = vmatprep.subr.bf16.mxu0 0
        %591 = vmatpush1.bf16.msra.mxu0 0
        %592 = vmatprep.subr.bf16.mxu0 0
        %593 = vmatpush1.bf16.msra.mxu0 0
        %594 = vmatprep.subr.bf16.mxu0 0
        %595 = vmatpush1.bf16.msra.mxu0 0
        %596 = vmatprep.subr.bf16.mxu0 0
        %597 = vmatpush1.bf16.msra.mxu0 0
        %598 = vmatprep.subr.bf16.mxu0 0
        %599 = vmatpush1.bf16.msra.mxu0 0
        %600 = vmatprep.subr.bf16.mxu0 0
        %601 = vmatpush1.bf16.msra.mxu0 0
        %602 = vmatprep.subr.bf16.mxu0 0
        %603 = vmatpush1.bf16.msra.mxu0 0
        %604 = vmatprep.subr.bf16.mxu0 0
        %605 = vmatpush1.bf16.msra.mxu0 0
        %606 = vmatprep.subr.bf16.mxu0 0
        %607 = vmatpush1.bf16.msra.mxu0 0
        %608 = vmatprep.subr.bf16.mxu0 0
        %609 = vmatpush1.bf16.msra.mxu0 0
        %610 = vmatprep.subr.bf16.mxu0 0
        %611 = vmatpush1.bf16.msra.mxu0 0
        %612 = vmatprep.subr.bf16.mxu0 0
        %613 = vmatpush1.bf16.msra.mxu0 0
        %614 = vmatprep.subr.bf16.mxu0 0
        %615 = vmatpush1.bf16.msra.mxu0 0
        %616 = vmatprep.mubr.bf16.mxu0 0
        %617 = vmatmul.mubr.bf16.gmra.mrb[0].mxu0 %v575
        %v618 = vpop.f32.mrb[0].mxu0
        %v619 = vadd.f32 %v571, %v618
        %v620 = vpop.f32.mrb[0].mxu0
        %v621 = vpop.f32.mrb[0].mxu0
        %v622 = vadd.f32 %v571, %v621
        %v623 = vpop.f32.mrb[0].mxu0
        %624 = vmatprep.mubr.bf16.mxu0 0
        %625 = vmatmul.mubr.bf16.gmra.mrb[0].mxu0 %v578
        %v626 = vpop.f32.mrb[0].mxu0
        %v627 = vadd.f32 %v571, %v626
        %v628 = vpop.f32.mrb[0].mxu0
        %v629 = vpop.f32.mrb[0].mxu0
        %v630 = vadd.f32 %v571, %v629
        %v631 = vpop.f32.mrb[0].mxu0
        %632 = vdwg.mxu0
        %vm633 = vcmask 130048
        %634 = vst.msk [vmem:[#allocation3] sm:$0xff] %vm633, %v619
        %635 = vst.msk [vmem:[#allocation3 + $0x8] sm:$0xff] %vm633, %v622
        %636 = vst.msk [vmem:[#allocation3 + $0x10] sm:$0xff] %vm633, %v627
        %637 = vst.msk [vmem:[#allocation3 + $0x18] sm:$0xff] %vm633, %v630
        %v638 = vld [vmem:[%s9] sm:$0xf]
        %v640 = vsel %vm580, %v638, 0
        %642 = vmatprep.subr.bf16.mxu0 0
        %643 = vmatpush1.bf16.msra.mxu0 %v640
        %644 = vmatprep.subr.bf16.mxu0 0
        %645 = vmatpush1.bf16.msra.mxu0 0
        %646 = vmatprep.subr.bf16.mxu0 0
        %647 = vmatpush1.bf16.msra.mxu0 0
        %648 = vmatprep.subr.bf16.mxu0 0
        %649 = vmatpush1.bf16.msra.mxu0 0
        %650 = vmatprep.subr.bf16.mxu0 0
        %651 = vmatpush1.bf16.msra.mxu0 0
        %652 = vmatprep.subr.bf16.mxu0 0
        %653 = vmatpush1.bf16.msra.mxu0 0
        %654 = vmatprep.subr.bf16.mxu0 0
        %655 = vmatpush1.bf16.msra.mxu0 0
        %656 = vmatprep.subr.bf16.mxu0 0
        %657 = vmatpush1.bf16.msra.mxu0 0
        %658 = vmatprep.subr.bf16.mxu0 0
        %659 = vmatpush1.bf16.msra.mxu0 0
        %660 = vmatprep.subr.bf16.mxu0 0
        %661 = vmatpush1.bf16.msra.mxu0 0
        %662 = vmatprep.subr.bf16.mxu0 0
        %663 = vmatpush1.bf16.msra.mxu0 0
        %664 = vmatprep.subr.bf16.mxu0 0
        %665 = vmatpush1.bf16.msra.mxu0 0
        %666 = vmatprep.subr.bf16.mxu0 0
        %667 = vmatpush1.bf16.msra.mxu0 0
        %668 = vmatprep.subr.bf16.mxu0 0
        %669 = vmatpush1.bf16.msra.mxu0 0
        %670 = vmatprep.subr.bf16.mxu0 0
        %671 = vmatpush1.bf16.msra.mxu0 0
        %672 = vmatprep.subr.bf16.mxu0 0
        %673 = vmatpush1.bf16.msra.mxu0 0
        %674 = vmatprep.mubr.bf16.mxu0 0
        %675 = vmatmul.mubr.bf16.gmra.mrb[0].mxu0 %v575
        %v676 = vpop.f32.mrb[0].mxu0
        %v677 = vadd.f32 0.0, %v676
        %v678 = vpop.f32.mrb[0].mxu0
        %v679 = vpop.f32.mrb[0].mxu0
        %v680 = vadd.f32 0.0, %v679
        %v681 = vpop.f32.mrb[0].mxu0
        %682 = vmatprep.mubr.bf16.mxu0 0
        %683 = vmatmul.mubr.bf16.gmra.mrb[0].mxu0 %v578
        %v684 = vpop.f32.mrb[0].mxu0
        %v685 = vadd.f32 0.0, %v684
        %v686 = vpop.f32.mrb[0].mxu0
        %v687 = vpop.f32.mrb[0].mxu0
        %v688 = vadd.f32 0.0, %v687
        %v689 = vpop.f32.mrb[0].mxu0
        %690 = vdwg.mxu0
        %vm691 = vcmask 261120
        %692 = vst.msk [vmem:[#allocation4] sm:$0xff] %vm691, %v677
        %693 = vst.msk [vmem:[#allocation4 + $0x8] sm:$0xff] %vm691, %v680
        %694 = vst.msk [vmem:[#allocation4 + $0x10] sm:$0xff] %vm691, %v685
        %695 = vst.msk [vmem:[#allocation4 + $0x18] sm:$0xff] %vm691, %v688
        %v696 = vld [vmem:[%s3] sm:$0xf]
        %v698 = vsel %vm580, %v696, 0
        %700 = vmatprep.subr.bf16.mxu0 0
        %701 = vmatpush1.bf16.msra.mxu0 %v698
        %702 = vmatprep.subr.bf16.mxu0 0
        %703 = vmatpush1.bf16.msra.mxu0 0
        %704 = vmatprep.subr.bf16.mxu0 0
        %705 = vmatpush1.bf16.msra.mxu0 0
        %706 = vmatprep.subr.bf16.mxu0 0
        %707 = vmatpush1.bf16.msra.mxu0 0
        %708 = vmatprep.subr.bf16.mxu0 0
        %709 = vmatpush1.bf16.msra.mxu0 0
        %710 = vmatprep.subr.bf16.mxu0 0
        %711 = vmatpush1.bf16.msra.mxu0 0
        %712 = vmatprep.subr.bf16.mxu0 0
        %713 = vmatpush1.bf16.msra.mxu0 0
        %714 = vmatprep.subr.bf16.mxu0 0
        %715 = vmatpush1.bf16.msra.mxu0 0
        %716 = vmatprep.subr.bf16.mxu0 0
        %717 = vmatpush1.bf16.msra.mxu0 0
        %718 = vmatprep.subr.bf16.mxu0 0
        %719 = vmatpush1.bf16.msra.mxu0 0
        %720 = vmatprep.subr.bf16.mxu0 0
        %721 = vmatpush1.bf16.msra.mxu0 0
        %722 = vmatprep.subr.bf16.mxu0 0
        %723 = vmatpush1.bf16.msra.mxu0 0
        %724 = vmatprep.subr.bf16.mxu0 0
        %725 = vmatpush1.bf16.msra.mxu0 0
        %726 = vmatprep.subr.bf16.mxu0 0
        %727 = vmatpush1.bf16.msra.mxu0 0
        %728 = vmatprep.subr.bf16.mxu0 0
        %729 = vmatpush1.bf16.msra.mxu0 0
        %730 = vmatprep.subr.bf16.mxu0 0
        %731 = vmatpush1.bf16.msra.mxu0 0
        %732 = vmatprep.mubr.bf16.mxu0 0
        %733 = vmatmul.mubr.bf16.gmra.mrb[0].mxu0 %v575
        %v734 = vpop.f32.mrb[0].mxu0
        %v735 = vadd.f32 0.0, %v734
        %v736 = vpop.f32.mrb[0].mxu0
        %v737 = vpop.f32.mrb[0].mxu0
        %v738 = vadd.f32 0.0, %v737
        %v739 = vpop.f32.mrb[0].mxu0
        %740 = vmatprep.mubr.bf16.mxu0 0
        %741 = vmatmul.mubr.bf16.gmra.mrb[0].mxu0 %v578
        %v742 = vpop.f32.mrb[0].mxu0
        %v743 = vadd.f32 0.0, %v742
        %v744 = vpop.f32.mrb[0].mxu0
        %v745 = vpop.f32.mrb[0].mxu0
        %v746 = vadd.f32 0.0, %v745
        %v747 = vpop.f32.mrb[0].mxu0
        %748 = vdwg.mxu0
        %749 = vst [vmem:[#allocation5] sm:$0xff] %v735
        %750 = vst [vmem:[#allocation5 + $0x8] sm:$0xff] %v738
        %751 = vst [vmem:[#allocation5 + $0x10] sm:$0xff] %v743
        %752 = vst [vmem:[#allocation5 + $0x18] sm:$0xff] %v746
        %v753 = vld [vmem:[#allocation2] sm:$0xff]
        loop: start=0, step=1, limit=4
        $region89: #{tpu_custom_call.1} parent=83 // loop_pre_header
          _
        $region90: #{tpu_custom_call.1} parent=83 // loop_header
          %s755 = sphi 0, %s759
          %p756 = scmp.ge.s32.totalorder %s755, 4
          %v760 = vphi %v753, %v853
        $region91: #{tpu_custom_call.1} parent=83 // loop_header_branch
          %758 = sbr.rel (%p756) target = $region95
        $region92: #{tpu_custom_call.1} parent=83 // loop_body
          %s761 = smul.u32 %s755, 8
          %s762 = scalar_lea.vmem [#allocation3], %s761
          %v763 = vld [vmem:[%s762] sm:$0xff]
          %s764 = scalar_lea.vmem [#allocation4], %s761
          %v765 = vld [vmem:[%s764] sm:$0xff]
          %s766 = scalar_lea.vmem [#allocation5], %s761
          %v767 = vld [vmem:[%s766] sm:$0xff]
          %v768 = vld [vmem:[%s4] sm:$0xff]
          %v769 = vld [vmem:[%s4 + $0x8] sm:$0xff]
          %v770 = vld [vmem:[%s5] sm:$0x1]
          %v772 = vlaneseq
          %v773 = vshrl.u32 %v772, 7
          %v774 = vsub.s32 0, %v773
          %v775 = vrot.slane %v770, %v774
          %v778 = vsel %vm633, %v760, 0
          %780 = vmatprep.subr.mxu0 0.0
          %781 = vmatpush1.msra.mxu0 %v768
          %782 = vmatprep.subr.mxu0 0.0
          %783 = vmatpush1.msra.mxu0 %v769
          %784 = vmatprep.subr.mxu0 0.0
          %785 = vmatpush1.msra.mxu0 0.0
          %786 = vmatprep.subr.mxu0 0.0
          %787 = vmatpush1.msra.mxu0 0.0
          %788 = vmatprep.subr.mxu0 0.0
          %789 = vmatpush1.msra.mxu0 0.0
          %790 = vmatprep.subr.mxu0 0.0
          %791 = vmatpush1.msra.mxu0 0.0
          %792 = vmatprep.subr.mxu0 0.0
          %793 = vmatpush1.msra.mxu0 0.0
          %794 = vmatprep.subr.mxu0 0.0
          %795 = vmatpush1.msra.mxu0 0.0
          %796 = vmatprep.subr.mxu0 0.0
          %797 = vmatpush1.msra.mxu0 0.0
          %798 = vmatprep.subr.mxu0 0.0
          %799 = vmatpush1.msra.mxu0 0.0
          %800 = vmatprep.subr.mxu0 0.0
          %801 = vmatpush1.msra.mxu0 0.0
          %802 = vmatprep.subr.mxu0 0.0
          %803 = vmatpush1.msra.mxu0 0.0
          %804 = vmatprep.subr.mxu0 0.0
          %805 = vmatpush1.msra.mxu0 0.0
          %806 = vmatprep.subr.mxu0 0.0
          %807 = vmatpush1.msra.mxu0 0.0
          %808 = vmatprep.subr.mxu0 0.0
          %809 = vmatpush1.msra.mxu0 0.0
          %810 = vmatprep.subr.mxu0 0.0
          %811 = vmatpush1.msra.mxu0 0.0
          %812 = vmatprep.subr.mxu0 0.0
          %813 = vmatpush1.msra.mxu0 0.0
          %814 = vmatprep.subr.mxu0 0.0
          %815 = vmatpush1.msra.mxu0 0.0
          %816 = vmatprep.subr.mxu0 0.0
          %817 = vmatpush1.msra.mxu0 0.0
          %818 = vmatprep.subr.mxu0 0.0
          %819 = vmatpush1.msra.mxu0 0.0
          %820 = vmatprep.subr.mxu0 0.0
          %821 = vmatpush1.msra.mxu0 0.0
          %822 = vmatprep.subr.mxu0 0.0
          %823 = vmatpush1.msra.mxu0 0.0
          %824 = vmatprep.subr.mxu0 0.0
          %825 = vmatpush1.msra.mxu0 0.0
          %826 = vmatprep.subr.mxu0 0.0
          %827 = vmatpush1.msra.mxu0 0.0
          %828 = vmatprep.subr.mxu0 0.0
          %829 = vmatpush1.msra.mxu0 0.0
          %830 = vmatprep.subr.mxu0 0.0
          %831 = vmatpush1.msra.mxu0 0.0
          %832 = vmatprep.subr.mxu0 0.0
          %833 = vmatpush1.msra.mxu0 0.0
          %834 = vmatprep.subr.mxu0 0.0
          %835 = vmatpush1.msra.mxu0 0.0
          %836 = vmatprep.subr.mxu0 0.0
          %837 = vmatpush1.msra.mxu0 0.0
          %838 = vmatprep.subr.mxu0 0.0
          %839 = vmatpush1.msra.mxu0 0.0
          %840 = vmatprep.subr.mxu0 0.0
          %841 = vmatpush1.msra.mxu0 0.0
          %842 = vmatprep.subr.mxu0 0.0
          %843 = vmatpush1.msra.mxu0 0.0
          %844 = vmatprep.mubr.f32.mxu0 0.0
          %845 = vmatmul.mubr.f32.gmra.mrb[0].mxu0 %v778
          %v846 = vpop.f32.mrb[0].mxu0
          %v847 = vadd.f32 %v775, %v846
          %v848 = vpop.f32.mrb[0].mxu0
          %849 = vdwg.mxu0
          %v850 = vadd.f32 %v847, %v763
          %v851 = vmul.f32 %v760, 0.0
          %v852 = vmax.f32 %v850, 0.0
          %v853 = vadd.f32 %v851, %v852
          %v854 = vpack.c.bf16 %v760, %v760
          %v855 = vld [vmem:[%s2] sm:$0xf]
          %v856 = vld [vmem:[%s2 + $0x4] sm:$0xf]
          %v859 = vunpack.c.l.b16 %v855
          %v860 = vunpack.c.l.b16 %v856
          %v861 = vpack.c.b16 %v860, %v859
          %v864 = vsel %vm633, %v854, 0
          %866 = vmatprep.subr.bf16.mxu0 0
          %867 = vmatpush1.bf16.msra.mxu0 %v861
          %868 = vmatprep.subr.bf16.mxu0 0
          %869 = vmatpush1.bf16.msra.mxu0 0
          %870 = vmatprep.subr.bf16.mxu0 0
          %871 = vmatpush1.bf16.msra.mxu0 0
          %872 = vmatprep.subr.bf16.mxu0 0
          %873 = vmatpush1.bf16.msra.mxu0 0
          %874 = vmatprep.subr.bf16.mxu0 0
          %875 = vmatpush1.bf16.msra.mxu0 0
          %876 = vmatprep.subr.bf16.mxu0 0
          %877 = vmatpush1.bf16.msra.mxu0 0
          %878 = vmatprep.subr.bf16.mxu0 0
          %879 = vmatpush1.bf16.msra.mxu0 0
          %880 = vmatprep.subr.bf16.mxu0 0
          %881 = vmatpush1.bf16.msra.mxu0 0
          %882 = vmatprep.subr.bf16.mxu0 0
          %883 = vmatpush1.bf16.msra.mxu0 0
          %884 = vmatprep.subr.bf16.mxu0 0
          %885 = vmatpush1.bf16.msra.mxu0 0
          %886 = vmatprep.subr.bf16.mxu0 0
          %887 = vmatpush1.bf16.msra.mxu0 0
          %888 = vmatprep.subr.bf16.mxu0 0
          %889 = vmatpush1.bf16.msra.mxu0 0
          %890 = vmatprep.subr.bf16.mxu0 0
          %891 = vmatpush1.bf16.msra.mxu0 0
          %892 = vmatprep.subr.bf16.mxu0 0
          %893 = vmatpush1.bf16.msra.mxu0 0
          %894 = vmatprep.subr.bf16.mxu0 0
          %895 = vmatpush1.bf16.msra.mxu0 0
          %896 = vmatprep.subr.bf16.mxu0 0
          %897 = vmatpush1.bf16.msra.mxu0 0
          %898 = vmatprep.mubr.bf16.mxu0 0
          %899 = vmatmul.mubr.bf16.gmra.mrb[0].mxu0 %v864
          %v900 = vpop.f32.mrb[0].mxu0
          %v901 = vadd.f32 0.0, %v900
          %v902 = vpop.f32.mrb[0].mxu0
          %v903 = vpop.f32.mrb[0].mxu0
          %v904 = vpop.f32.mrb[0].mxu0
          %905 = vdwg.mxu0
          %v906 = vmul.f32 %v901, %v767
          %v907 = vpack.c.bf16 %v906, %v906
          %v908 = vld [vmem:[%s8] sm:$0xf]
          %v909 = vld [vmem:[%s8 + $0x4] sm:$0xf]
          %v910 = vld [vmem:[%s8 + $0x8] sm:$0xf]
          %v911 = vld [vmem:[%s8 + $0xc] sm:$0xf]
          %v912 = vld [vmem:[%s8 + $0x10] sm:$0xf]
          %v913 = vld [vmem:[%s8 + $0x14] sm:$0xf]
          %v914 = vld [vmem:[%s8 + $0x18] sm:$0xf]
          %v915 = vld [vmem:[%s8 + $0x1c] sm:$0xf]
          %v916 = vld [vmem:[%s8 + $0x20] sm:$0xf]
          %v917 = vld [vmem:[%s8 + $0x24] sm:$0xf]
          %v918 = vld [vmem:[%s8 + $0x28] sm:$0xf]
          %v919 = vld [vmem:[%s8 + $0x2c] sm:$0xf]
          %v920 = vld [vmem:[%s8 + $0x30] sm:$0xf]
          %v921 = vld [vmem:[%s8 + $0x34] sm:$0xf]
          %v922 = vld [vmem:[%s8 + $0x38] sm:$0xf]
          %v923 = vld [vmem:[%s8 + $0x3c] sm:$0xf]
          %v940 = vunpack.c.l.b16 %v908
          %v941 = vunpack.c.l.b16 %v909
          %v942 = vunpack.c.l.b16 %v910
          %v943 = vunpack.c.l.b16 %v911
          %v944 = vunpack.c.l.b16 %v912
          %v945 = vunpack.c.l.b16 %v913
          %v946 = vunpack.c.l.b16 %v914
          %v947 = vunpack.c.l.b16 %v915
          %v948 = vunpack.c.l.b16 %v916
          %v949 = vunpack.c.l.b16 %v917
          %v950 = vunpack.c.l.b16 %v918
          %v951 = vunpack.c.l.b16 %v919
          %v952 = vunpack.c.l.b16 %v920
          %v953 = vunpack.c.l.b16 %v921
          %v954 = vunpack.c.l.b16 %v922
          %v955 = vunpack.c.l.b16 %v923
          %v956 = vpack.c.b16 %v941, %v940
          %v957 = vpack.c.b16 %v943, %v942
          %v958 = vpack.c.b16 %v945, %v944
          %v959 = vpack.c.b16 %v947, %v946
          %v960 = vpack.c.b16 %v949, %v948
          %v961 = vpack.c.b16 %v951, %v950
          %v962 = vpack.c.b16 %v953, %v952
          %v963 = vpack.c.b16 %v955, %v954
          %972 = vmatprep.subr.bf16.mxu0 0
          %973 = vmatpush1.bf16.msra.mxu0 %v956
          %974 = vmatprep.subr.bf16.mxu0 0
          %975 = vmatpush1.bf16.msra.mxu0 %v957
          %976 = vmatprep.subr.bf16.mxu0 0
          %977 = vmatpush1.bf16.msra.mxu0 %v958
          %978 = vmatprep.subr.bf16.mxu0 0
          %979 = vmatpush1.bf16.msra.mxu0 %v959
          %980 = vmatprep.subr.bf16.mxu0 0
          %981 = vmatpush1.bf16.msra.mxu0 %v960
          %982 = vmatprep.subr.bf16.mxu0 0
          %983 = vmatpush1.bf16.msra.mxu0 %v961
          %984 = vmatprep.subr.bf16.mxu0 0
          %985 = vmatpush1.bf16.msra.mxu0 %v962
          %986 = vmatprep.subr.bf16.mxu0 0
          %987 = vmatpush1.bf16.msra.mxu0 %v963
          %988 = vmatprep.subr.bf16.mxu0 0
          %989 = vmatpush1.bf16.msra.mxu0 0
          %990 = vmatprep.subr.bf16.mxu0 0
          %991 = vmatpush1.bf16.msra.mxu0 0
          %992 = vmatprep.subr.bf16.mxu0 0
          %993 = vmatpush1.bf16.msra.mxu0 0
          %994 = vmatprep.subr.bf16.mxu0 0
          %995 = vmatpush1.bf16.msra.mxu0 0
          %996 = vmatprep.subr.bf16.mxu0 0
          %997 = vmatpush1.bf16.msra.mxu0 0
          %998 = vmatprep.subr.bf16.mxu0 0
          %999 = vmatpush1.bf16.msra.mxu0 0
          %1000 = vmatprep.subr.bf16.mxu0 0
          %1001 = vmatpush1.bf16.msra.mxu0 0
          %1002 = vmatprep.subr.bf16.mxu0 0
          %1003 = vmatpush1.bf16.msra.mxu0 0
          %1004 = vmatprep.mubr.bf16.mxu0 0
          %1005 = vmatmul.mubr.bf16.gmra.mrb[0].mxu0 %v907
          %v1006 = vpop.f32.mrb[0].mxu0
          %v1007 = vadd.f32 %v765, %v1006
          %v1008 = vpop.f32.mrb[0].mxu0
          %v1009 = vpop.f32.mrb[0].mxu0
          %v1010 = vpop.f32.mrb[0].mxu0
          %1011 = vdwg.mxu0
          %v1012 = vmax.f32 %v1007, 0.0
          %v1013 = vpack.c.bf16 %v1012, %v1012
          %v1014 = vld [vmem:[%s10] sm:$0xf]
          %v1015 = vld [vmem:[%s10 + $0x4] sm:$0xf]
          %v1016 = vld [vmem:[%s10 + $0x8] sm:$0xf]
          %v1017 = vld [vmem:[%s10 + $0xc] sm:$0xf]
          %v1018 = vld [vmem:[%s11] sm:$0x1]
          %v1020 = vlaneseq
          %v1021 = vshrl.u32 %v1020, 7
          %v1022 = vsub.s32 0, %v1021
          %v1023 = vrot.slane %v1018, %v1022
          %v1029 = vunpack.c.l.b16 %v1014
          %v1030 = vunpack.c.l.b16 %v1015
          %v1031 = vunpack.c.l.b16 %v1016
          %v1032 = vunpack.c.l.b16 %v1017
          %v1033 = vpack.c.b16 %v1030, %v1029
          %v1034 = vpack.c.b16 %v1032, %v1031
          %v1038 = vsel %vm691, %v1013, 0
          %1040 = vmatprep.subr.bf16.mxu0 0
          %1041 = vmatpush1.bf16.msra.mxu0 %v1033
          %1042 = vmatprep.subr.bf16.mxu0 0
          %1043 = vmatpush1.bf16.msra.mxu0 %v1034
          %1044 = vmatprep.subr.bf16.mxu0 0
          %1045 = vmatpush1.bf16.msra.mxu0 0
          %1046 = vmatprep.subr.bf16.mxu0 0
          %1047 = vmatpush1.bf16.msra.mxu0 0
          %1048 = vmatprep.subr.bf16.mxu0 0
          %1049 = vmatpush1.bf16.msra.mxu0 0
          %1050 = vmatprep.subr.bf16.mxu0 0
          %1051 = vmatpush1.bf16.msra.mxu0 0
          %1052 = vmatprep.subr.bf16.mxu0 0
          %1053 = vmatpush1.bf16.msra.mxu0 0
          %1054 = vmatprep.subr.bf16.mxu0 0
          %1055 = vmatpush1.bf16.msra.mxu0 0
          %1056 = vmatprep.subr.bf16.mxu0 0
          %1057 = vmatpush1.bf16.msra.mxu0 0
          %1058 = vmatprep.subr.bf16.mxu0 0
          %1059 = vmatpush1.bf16.msra.mxu0 0
          %1060 = vmatprep.subr.bf16.mxu0 0
          %1061 = vmatpush1.bf16.msra.mxu0 0
          %1062 = vmatprep.subr.bf16.mxu0 0
          %1063 = vmatpush1.bf16.msra.mxu0 0
          %1064 = vmatprep.subr.bf16.mxu0 0
          %1065 = vmatpush1.bf16.msra.mxu0 0
          %1066 = vmatprep.subr.bf16.mxu0 0
          %1067 = vmatpush1.bf16.msra.mxu0 0
          %1068 = vmatprep.subr.bf16.mxu0 0
          %1069 = vmatpush1.bf16.msra.mxu0 0
          %1070 = vmatprep.subr.bf16.mxu0 0
          %1071 = vmatpush1.bf16.msra.mxu0 0
          %1072 = vmatprep.mubr.bf16.mxu0 0
          %1073 = vmatmul.mubr.bf16.gmra.mrb[0].mxu0 %v1038
          %v1074 = vpop.f32.mrb[0].mxu0
          %v1075 = vadd.f32 %v1023, %v1074
          %v1076 = vpop.f32.mrb[0].mxu0
          %v1077 = vpop.f32.mrb[0].mxu0
          %v1078 = vpop.f32.mrb[0].mxu0
          %1079 = vdwg.mxu0
          %v1080 = vsel %vm691, %v1075, 0.0
          %1081 = vadd.xlane.f32.xlu0 %v1080
          %v1082 = vpop.xlane.xlu0 %1081
          %v1083 = vrcp.pop 32.0
          %v1084 = vmul.f32 %v1082, %v1083
          %v1085 = vmul.f32 %v1075, %v1075
          %v1086 = vsel %vm691, %v1085, 0.0
          %1087 = vadd.xlane.f32.xlu0 %v1086
          %v1088 = vpop.xlane.xlu0 %1087
          %v1089 = vmul.f32 %v1088, %v1083
          %v1090 = vmul.f32 %v1084, %v1084
          %v1091 = vsub.f32 %v1089, %v1090
          %v1092 = vsub.f32 %v1075, %v1084
          %v1093 = vadd.f32 %v1091, 1e-05
          %v1094 = vrsqrt.pop %v1093
          %v1095 = vmul.f32 %v1092, %v1094
          %v1096 = vld [vmem:[%s12] sm:$0x1]
          %v1098 = vlaneseq
          %v1099 = vshrl.u32 %v1098, 7
          %v1100 = vsub.s32 0, %v1099
          %v1101 = vrot.slane %v1096, %v1100
          %v1103 = vmul.f32 %v1095, %v1101
          %v1104 = vld [vmem:[%s13] sm:$0x1]
          %v1106 = vlaneseq
          %v1107 = vshrl.u32 %v1106, 7
          %v1108 = vsub.s32 0, %v1107
          %v1109 = vrot.slane %v1104, %v1108
          %v1111 = vadd.f32 %v1103, %v1109
          %v1112 = vmax.f32 %v1111, 0.0
          %v1113 = vadd.f32 %v1012, %v1112
          %s1114 = scalar_lea.vmem [#allocation6], %s761
          %1115 = vst.msk [vmem:[%s1114] sm:$0xff] %vm691, %v1113
        $region93: #{tpu_custom_call.1} parent=83 // loop_footer
          %s759 = sadd.s32 1, %s755
        $region94: #{tpu_custom_call.1} parent=83 // loop_footer_branch
          %754 = sbr.rel target = $region90
        $region95: #{tpu_custom_call.1} parent=83 // loop_exit
          _
        %1116 = vst.msk [vmem:[#allocation2] sm:$0xff] %vm633, %v760
        %1117 = vst.msk [vmem:[#allocation7] sm:$0xff] %vm633, %v760
        %v1118 = vld [vmem:[#allocation6] sm:$0xff]
        %v1119 = vld [vmem:[#allocation6 + $0x8] sm:$0xff]
        %v1120 = vld [vmem:[#allocation6 + $0x10] sm:$0xff]
        %v1121 = vld [vmem:[#allocation6 + $0x18] sm:$0xff]
        %v1122 = vpack.c.bf16 %v1119, %v1118
        %v1123 = vpack.c.bf16 %v1121, %v1120
        %v1124 = vld [vmem:[%s14] sm:$0xf]
        %v1125 = vld [vmem:[%s14 + $0x4] sm:$0xf]
        %v1126 = vld [vmem:[%s14 + $0x8] sm:$0xf]
        %v1127 = vld [vmem:[%s14 + $0xc] sm:$0xf]
        %v1128 = vld [vmem:[%s15] sm:$0x1]
        %v1130 = vlaneseq
        %v1131 = vshrl.u32 %v1130, 7
        %v1132 = vsub.s32 0, %v1131
        %v1133 = vrot.slane %v1128, %v1132
        %v1139 = vunpack.c.l.b16 %v1124
        %v1140 = vunpack.c.l.b16 %v1125
        %v1141 = vunpack.c.l.b16 %v1126
        %v1142 = vunpack.c.l.b16 %v1127
        %v1143 = vpack.c.b16 %v1140, %v1139
        %v1144 = vpack.c.b16 %v1142, %v1141
        %v1148 = vsel %vm691, %v1122, 0
        %v1151 = vsel %vm691, %v1123, 0
        %1153 = vmatprep.subr.bf16.mxu0 0
        %1154 = vmatpush1.bf16.msra.mxu0 %v1143
        %1155 = vmatprep.subr.bf16.mxu0 0
        %1156 = vmatpush1.bf16.msra.mxu0 %v1144
        %1157 = vmatprep.subr.bf16.mxu0 0
        %1158 = vmatpush1.bf16.msra.mxu0 0
        %1159 = vmatprep.subr.bf16.mxu0 0
        %1160 = vmatpush1.bf16.msra.mxu0 0
        %1161 = vmatprep.subr.bf16.mxu0 0
        %1162 = vmatpush1.bf16.msra.mxu0 0
        %1163 = vmatprep.subr.bf16.mxu0 0
        %1164 = vmatpush1.bf16.msra.mxu0 0
        %1165 = vmatprep.subr.bf16.mxu0 0
        %1166 = vmatpush1.bf16.msra.mxu0 0
        %1167 = vmatprep.subr.bf16.mxu0 0
        %1168 = vmatpush1.bf16.msra.mxu0 0
        %1169 = vmatprep.subr.bf16.mxu0 0
        %1170 = vmatpush1.bf16.msra.mxu0 0
        %1171 = vmatprep.subr.bf16.mxu0 0
        %1172 = vmatpush1.bf16.msra.mxu0 0
        %1173 = vmatprep.subr.bf16.mxu0 0
        %1174 = vmatpush1.bf16.msra.mxu0 0
        %1175 = vmatprep.subr.bf16.mxu0 0
        %1176 = vmatpush1.bf16.msra.mxu0 0
        %1177 = vmatprep.subr.bf16.mxu0 0
        %1178 = vmatpush1.bf16.msra.mxu0 0
        %1179 = vmatprep.subr.bf16.mxu0 0
        %1180 = vmatpush1.bf16.msra.mxu0 0
        %1181 = vmatprep.subr.bf16.mxu0 0
        %1182 = vmatpush1.bf16.msra.mxu0 0
        %1183 = vmatprep.subr.bf16.mxu0 0
        %1184 = vmatpush1.bf16.msra.mxu0 0
        %1185 = vmatprep.mubr.bf16.mxu0 0
        %1186 = vmatmul.mubr.bf16.gmra.mrb[0].mxu0 %v1148
        %v1187 = vpop.f32.mrb[0].mxu0
        %v1188 = vadd.f32 %v1133, %v1187
        %v1189 = vpop.f32.mrb[0].mxu0
        %v1190 = vpop.f32.mrb[0].mxu0
        %v1191 = vadd.f32 %v1133, %v1190
        %v1192 = vpop.f32.mrb[0].mxu0
        %1193 = vmatprep.mubr.bf16.mxu0 0
        %1194 = vmatmul.mubr.bf16.gmra.mrb[0].mxu0 %v1151
        %v1195 = vpop.f32.mrb[0].mxu0
        %v1196 = vadd.f32 %v1133, %v1195
        %v1197 = vpop.f32.mrb[0].mxu0
        %v1198 = vpop.f32.mrb[0].mxu0
        %v1199 = vadd.f32 %v1133, %v1198
        %v1200 = vpop.f32.mrb[0].mxu0
        %1201 = vdwg.mxu0
        %vm1202 = vcmask 31744
        %1203 = vst.msk [vmem:[%s549] sm:$0xff] %vm1202, %v1188
        %1204 = vst.msk [vmem:[%s549 + $0x8] sm:$0xff] %vm1202, %v1191
        %1205 = vst.msk [vmem:[%s549 + $0x10] sm:$0xff] %vm1202, %v1196
        %1206 = vst.msk [vmem:[%s549 + $0x18] sm:$0xff] %vm1202, %v1199
        %s1207 = smul.u32 4, %s30
        %p1208 = scmp.lt.s32.totalorder %s1207, 7
        %s1209 = scalar_select %p1208, %s1207, 7
        %s1210 = smul.addr %s1209, 8
        %s1211 = scalar_lea.vmem %s16, %s1210
        // Predicated region
        $region96: #{tpu_custom_call.1} parent=83 // pred_check
          %p1212 = pneg %p389
        $region97: #{tpu_custom_call.1} parent=83 // pred_check_branch
          %1214 = sbr.rel (%p1212) target = $region99
        $region98: #{tpu_custom_call.1} parent=83 // pred_region
          %s1215 = smul.u32 4, %s30
        $region99: #{tpu_custom_call.1} parent=83 // pred_fallthru
          _
        // Predicated region
        $region100: #{tpu_custom_call.1} parent=83 // pred_check
          %p1216 = pneg %p410
        $region101: #{tpu_custom_call.1} parent=83 // pred_check_branch
          %1218 = sbr.rel (%p1216) target = $region103
        $region102: #{tpu_custom_call.1} parent=83 // pred_region
          %s1220 = ssub.s32 128, 128
          %1221 = vsyncadd [#allocation8], %s1220
          %s1223 = sshll.u32 [#allocation7], 4
          %s1224 = int_to_ptr.vmem [resolvable:$true] %s1223
          %1226 = dma.vmem_to_hbm [thread:$0]  %s1224, 128, %s17, [#allocation8]
        $region103: #{tpu_custom_call.1} parent=83 // pred_fallthru
          _
        // Predicated region
        $region104: #{tpu_custom_call.1} parent=83 // pred_check
          %p1227 = pneg %p410
        $region105: #{tpu_custom_call.1} parent=83 // pred_check_branch
          %1229 = sbr.rel (%p1227) target = $region107
        $region106: #{tpu_custom_call.1} parent=83 // pred_region
          %1230 = dma.done [#allocation8], 128
        $region107: #{tpu_custom_call.1} parent=83 // pred_fallthru
          _
      $region84: #{tpu_custom_call.1} parent=5 // pred_fallthru
        _
      %p1231 = scmp.le.s32.totalorder 2, %s25
      // Predicated region
      $region108: #{tpu_custom_call.1} parent=5 // pred_check
        %p1232 = pneg %p1231
      $region109: #{tpu_custom_call.1} parent=5 // pred_check_branch
        %1234 = sbr.rel (%p1232) target = $region111
      $region110: #{tpu_custom_call.1} parent=5 // pred_region
        %s1235 = ssub.s32 %s25, 2
        // Predicated region
        $region112: #{tpu_custom_call.1} parent=110 // pred_check
          %p1236 = pneg %p395
        $region113: #{tpu_custom_call.1} parent=110 // pred_check_branch
          %1238 = sbr.rel (%p1236) target = $region115
        $region114: #{tpu_custom_call.1} parent=110 // pred_region
          %s1239 = smul.u32 4, %s31
          %p1240 = scmp.lt.s32.totalorder %s1239, 7
          %s1241 = scalar_select %p1240, %s1239, 7
          %s1242 = smul.addr %s1241, 8
          %s1243 = scalar_lea.vmem %s16, %s1242
        $region115: #{tpu_custom_call.1} parent=110 // pred_fallthru
          _
      $region111: #{tpu_custom_call.1} parent=5 // pred_fallthru
        _
    $region6: #{tpu_custom_call.1} parent=1 // loop_footer
      %s29 = sadd.s32 1, %s25
    $region7: #{tpu_custom_call.1} parent=1 // loop_footer_branch
      %24 = sbr.rel target = $region3
    $region8: #{tpu_custom_call.1} parent=1 // loop_exit
      _
    %1244 = vsyncpa [#allocation8], 1
    %s1245 = scalar_lea.sflag [#allocation8], 1
    %1246 = vsyncpa %s1245, 1

</llo_original>
